<compile_context>
chip_gen: v7x
topology: tpu7x:2x2x1
jax: 0.10.0
libtpu: 0.0.40
codegen_flags: <defaults>
</compile_context>

<pallas_src>
import functools

import jax
import jax.numpy as jnp
from jax.experimental import pallas as pl
from jax.experimental.pallas import tpu as pltpu

IN_FEATURES = 64 * 12   # 768
HIDDEN = 128
OUT_FEATURES = 1


def chess_eval_kernel(x_ref, w1_ref, b1_ref, w2t_ref, b2_ref, o_ref):
    # Cast the streamed x tile to bf16 in VMEM (VPU work, hidden under the DMA
    # of the next tile).  Exact for 0/1 board planes; uses the MXU bf16 path.
    x = x_ref[...].astype(jnp.bfloat16)

    # fc1: bf16 MXU matmul with f32 accumulation, bias add + ReLU on the VPU.
    h = jnp.dot(x, w1_ref[...], preferred_element_type=jnp.float32)
    h = jnp.maximum(h + b1_ref[...], 0.0)                  # (block_b, 128) f32

    # fc2: contract the hidden dim of (1,128) and (block_b,128) -> (1, block_b),
    # putting the batch on the lane axis so the output store is lane-dense.
    out = jnp.einsum("ok,bk->ob", w2t_ref[...], h,
                     preferred_element_type=jnp.float32)   # (1, block_b)
    o_ref[...] = (out + b2_ref[...]).astype(o_ref.dtype)


@functools.partial(jax.jit, static_argnames=("block_b",))
def chess_evaluator(x, w1, b1, w2, b2, *, block_b=1024):
    """Forward pass of ChessEvaluator.

    x : (B, ...) with prod(...)==768, e.g. (B, 12, 8, 8), any float dtype
        (cast to bf16 in-kernel; exact for 0/1 chess planes).
    w1: (768, 128)  b1: (1, 128)  w2: (128, 1)  b2: (1, 1)   (x @ W + b layout,
        equivalent to PyTorch's x @ W.T with its (out, in) convention)
    returns (B, 1) float32.
    """
    assert block_b % 128 == 0, "block_b must be a multiple of 128"

    x2d = x.reshape(-1, IN_FEATURES)
    B = x2d.shape[0]

    # Clamp the batch block to the (lane-rounded) batch so tiny batches don't
    # DMA a mostly-padding tile.  B is static under jit, so this is trace-time.
    blk = min(block_b, max(128, ((B + 127) // 128) * 128))

    w1b = w1.astype(jnp.bfloat16)
    w2t = w2.reshape(1, HIDDEN).astype(jnp.float32)          # (1, 128) == w2.T
    b1f = b1.reshape(1, HIDDEN).astype(jnp.float32)
    b2f = b2.reshape(1, OUT_FEATURES).astype(jnp.float32)

    num_tiles = pl.cdiv(B, blk)   # partial last tile handled by Pallas; no pad copy

    out_row = pl.pallas_call(
        chess_eval_kernel,
        out_shape=jax.ShapeDtypeStruct((1, num_tiles * blk), jnp.float32),
        grid_spec=pltpu.PrefetchScalarGridSpec(
            num_scalar_prefetch=0,
            grid=(num_tiles,),
            in_specs=[
                pl.BlockSpec((blk, IN_FEATURES), lambda i: (i, 0)),       # x tile (streamed)
                pl.BlockSpec((IN_FEATURES, HIDDEN), lambda i: (0, 0)),    # W1 (resident)
                pl.BlockSpec((1, HIDDEN), lambda i: (0, 0)),              # b1
                pl.BlockSpec((1, HIDDEN), lambda i: (0, 0)),              # W2^T
                pl.BlockSpec((1, OUT_FEATURES), lambda i: (0, 0)),        # b2
            ],
            out_specs=pl.BlockSpec((1, blk), lambda i: (0, i)),           # lane-dense
        ),
        compiler_params=pltpu.CompilerParams(
            dimension_semantics=("parallel",)),
    )(x2d, w1b, b1f, w2t, b2f)

    return out_row[0, :B].reshape(B, OUT_FEATURES)


def init_params(key):
    """Deterministic init mimicking PyTorch's default Linear init
    (uniform(-1/sqrt(fan_in), 1/sqrt(fan_in)))."""
    k1, k2, k3, k4 = jax.random.split(key, 4)
    bound1 = 1.0 / jnp.sqrt(IN_FEATURES)
    bound2 = 1.0 / jnp.sqrt(HIDDEN)
    w1 = jax.random.uniform(k1, (IN_FEATURES, HIDDEN), jnp.float32, -bound1, bound1)
    b1 = jax.random.uniform(k2, (1, HIDDEN), jnp.float32, -bound1, bound1)
    w2 = jax.random.uniform(k3, (HIDDEN, OUT_FEATURES), jnp.float32, -bound2, bound2)
    b2 = jax.random.uniform(k4, (1, OUT_FEATURES), jnp.float32, -bound2, bound2)
    return w1, b1, w2, b2


if __name__ == "__main__":
    key = jax.random.PRNGKey(0)
    k_in, k_p = jax.random.split(key)

    # Small deterministic input: batch=2 boards of 12 one-hot 8x8 planes,
    # stored as bf16 (0/1 values are exact in bf16).
    x = jax.random.bernoulli(k_in, 0.25, (2, 12, 8, 8)).astype(jnp.bfloat16)

    w1, b1, w2, b2 = init_params(k_p)

    out = chess_evaluator(x, w1, b1, w2, b2)
    out = jax.block_until_ready(out)

    # Pure-JAX reference of the same forward pass (same bf16 rounding on x/w1).
    x2d = x.reshape(-1, IN_FEATURES).astype(jnp.float32)
    w1b = w1.astype(jnp.bfloat16).astype(jnp.float32)
    h = jnp.maximum(x2d @ w1b + b1, 0.0)
    ref = h @ w2 + b2

    assert out.shape == (2, 1), out.shape
    assert jnp.allclose(out, ref, atol=2e-2, rtol=2e-2), (out, ref)

    print("KERNEL_OK")
</pallas_src>

<mosaic_0001>
module attributes {stable_mosaic.version = 11 : i64} {
  func.func @chess_eval_kernel(%arg0: i32, %arg1: memref<128x768xbf16, #tpu.memory_space<vmem>>, %arg2: memref<768x128xbf16, #tpu.memory_space<vmem>>, %arg3: memref<1x128xf32, #tpu.memory_space<vmem>>, %arg4: memref<1x128xf32, #tpu.memory_space<vmem>>, %arg5: memref<1x1xf32, #tpu.memory_space<vmem>>, %arg6: memref<1x128xf32, #tpu.memory_space<vmem>>) attributes {dimension_semantics = [#tpu.dimension_semantics<parallel>], iteration_bounds = array<i64: 1>, scalar_prefetch = 0 : i64, scratch_operands = 0 : i64, tpu.core_type = #tpu.core_type<tc>, window_params = [{transform_indices = @transform_0, window_bounds = array<i64: 128, 768>}, {pipeline_mode = #tpu.pipeline_mode<synchronous>, transform_indices = @transform_1, window_bounds = array<i64: 768, 128>}, {pipeline_mode = #tpu.pipeline_mode<synchronous>, transform_indices = @transform_2, window_bounds = array<i64: 1, 128>}, {pipeline_mode = #tpu.pipeline_mode<synchronous>, transform_indices = @transform_3, window_bounds = array<i64: 1, 128>}, {pipeline_mode = #tpu.pipeline_mode<synchronous>, transform_indices = @transform_4, window_bounds = array<i64: 1, 1>}, {transform_indices = @transform_5, window_bounds = array<i64: 1, 128>}]} {
    %c0 = arith.constant 0 : index
    %c0_0 = arith.constant 0 : index
    %0 = vector.load %arg1[%c0, %c0_0] : memref<128x768xbf16, #tpu.memory_space<vmem>>, vector<128x768xbf16>
    %c0_1 = arith.constant 0 : index
    %c0_2 = arith.constant 0 : index
    %1 = vector.load %arg2[%c0_1, %c0_2] : memref<768x128xbf16, #tpu.memory_space<vmem>>, vector<768x128xbf16>
    %cst = arith.constant dense<0.000000e+00> : vector<128x128xf32>
    %2 = tpu.matmul %0, %1, %cst {dimension_numbers = #tpu.dot_dimension_numbers<[1], [0], [0], [1], [0, 0, 1, 1], [], []>} : vector<128x768xbf16>, vector<768x128xbf16>, vector<128x128xf32> -> vector<128x128xf32>
    %c0_3 = arith.constant 0 : index
    %c0_4 = arith.constant 0 : index
    %3 = vector.load %arg3[%c0_3, %c0_4] : memref<1x128xf32, #tpu.memory_space<vmem>>, vector<1x128xf32>
    %4 = vector.broadcast %3 : vector<1x128xf32> to vector<128x128xf32>
    %5 = arith.addf %2, %4 : vector<128x128xf32>
    %cst_5 = arith.constant 0.000000e+00 : f32
    %6 = vector.broadcast %cst_5 : f32 to vector<128x128xf32>
    %7 = arith.maximumf %5, %6 : vector<128x128xf32>
    %c0_6 = arith.constant 0 : index
    %c0_7 = arith.constant 0 : index
    %8 = vector.load %arg4[%c0_6, %c0_7] : memref<1x128xf32, #tpu.memory_space<vmem>>, vector<1x128xf32>
    "tpu.trace_start"() <{level = 10 : i32, message = "ok,bk->ob"}> : () -> ()
    %cst_8 = arith.constant dense<0.000000e+00> : vector<1x128xf32>
    %9 = tpu.matmul %8, %7, %cst_8 {dimension_numbers = #tpu.dot_dimension_numbers<[1], [1], [0], [0], [0, 0, 1, 0], [], []>} : vector<1x128xf32>, vector<128x128xf32>, vector<1x128xf32> -> vector<1x128xf32>
    "tpu.trace_stop"() : () -> ()
    %c0_9 = arith.constant 0 : index
    %c0_10 = arith.constant 0 : index
    %10 = vector.load %arg5[%c0_9, %c0_10] : memref<1x1xf32, #tpu.memory_space<vmem>>, vector<1x1xf32>
    %11 = vector.broadcast %10 : vector<1x1xf32> to vector<1x128xf32>
    %12 = arith.addf %9, %11 : vector<1x128xf32>
    %c0_11 = arith.constant 0 : index
    %c0_12 = arith.constant 0 : index
    %13 = vector.load %arg6[%c0_11, %c0_12] : memref<1x128xf32, #tpu.memory_space<vmem>>, vector<1x128xf32>
    tpu.vector_store %arg6[%c0_11, %c0_12], %12 {strides = array<i32>} : memref<1x128xf32, #tpu.memory_space<vmem>>, vector<1x128xf32>,
    return
  }
  func.func @transform_0(%arg0: i32) -> (i32, i32) {
    %c0_i32 = arith.constant 0 : i32
    %c0_i32_0 = arith.constant 0 : i32
    return %arg0, %c0_i32 : i32, i32
  }
  func.func @transform_1(%arg0: i32) -> (i32, i32) {
    %c0_i32 = arith.constant 0 : i32
    %c0_i32_0 = arith.constant 0 : i32
    %c0_i32_1 = arith.constant 0 : i32
    return %c0_i32, %c0_i32_0 : i32, i32
  }
  func.func @transform_2(%arg0: i32) -> (i32, i32) {
    %c0_i32 = arith.constant 0 : i32
    %c0_i32_0 = arith.constant 0 : i32
    %c0_i32_1 = arith.constant 0 : i32
    return %c0_i32, %c0_i32_0 : i32, i32
  }
  func.func @transform_3(%arg0: i32) -> (i32, i32) {
    %c0_i32 = arith.constant 0 : i32
    %c0_i32_0 = arith.constant 0 : i32
    %c0_i32_1 = arith.constant 0 : i32
    return %c0_i32, %c0_i32_0 : i32, i32
  }
  func.func @transform_4(%arg0: i32) -> (i32, i32) {
    %c0_i32 = arith.constant 0 : i32
    %c0_i32_0 = arith.constant 0 : i32
    %c0_i32_1 = arith.constant 0 : i32
    return %c0_i32, %c0_i32_0 : i32, i32
  }
  func.func @transform_5(%arg0: i32) -> (i32, i32) {
    %c0_i32 = arith.constant 0 : i32
    %c0_i32_0 = arith.constant 0 : i32
    return %c0_i32, %arg0 : i32, i32
  }
}

</mosaic_0001>

<llo_original>
// kernel: chess_evaluator.1
$region0: #{chess_evaluator.1}
  #allocation0 [shape = 'u32[]', space=smem, size = 0x4, offset = 0x4, fixed_abs, tag = 'smem constant byte address 0x4 - core index']
  #allocation1 [shape = 'u32[144,128]{1,0:T(1,128)}', space=vmem, size = 0x12000, scoped, tag = 'internal scratch']
  #allocation2 [shape = 'f32[1,1]{1,0:T(1,128)S(1)}', space=vmem, size = 0x200, scoped, tag = 'scoped memory for chess_evaluator.1']
  %s0 = inlined_call_operand.vmem [shape: bf16[2,768], index: 0, kind: input, shape index: {}]
  %s1 = inlined_call_operand.vmem [shape: bf16[768,128], index: 1, kind: input, shape index: {}]
  %s2 = inlined_call_operand.vmem [shape: f32[1,128], index: 2, kind: input, shape index: {}]
  %s3 = inlined_call_operand.vmem [shape: f32[1,128], index: 3, kind: input, shape index: {}]
  %s4 = inlined_call_operand.<no memory space> [shape: f32[1,1], index: 4, kind: input, shape index: {}]
  %s5 = inlined_call_operand.vmem [shape: f32[1,128], index: 5, kind: output, shape index: {}]
  %s6 = sld [smem:[#allocation0]]
  $region30: #{chess_evaluator.1} parent=0
    _
  %s8 = ssub.s32 1, %s6
  %s9 = scalar_select 0, %s8, %s6
  %v10 = vstv %s4
  %11 = vst [vmem:[#allocation2] sm:$0x1] %v10
  // Predicated region
  $region2: #{chess_evaluator.1} parent=0 // pred_check
    _
  $region3: #{chess_evaluator.1} parent=0 // pred_check_branch
    %13 = sbr.rel (0) target = $region5
  $region4: #{chess_evaluator.1} parent=0 // pred_region
    _
  $region5: #{chess_evaluator.1} parent=0 // pred_fallthru
    _
  // Predicated region
  $region6: #{chess_evaluator.1} parent=0 // pred_check
    _
  $region7: #{chess_evaluator.1} parent=0 // pred_check_branch
    %15 = sbr.rel (0) target = $region9
  $region8: #{chess_evaluator.1} parent=0 // pred_region
    _
  $region9: #{chess_evaluator.1} parent=0 // pred_fallthru
    _
  // Predicated region
  $region10: #{chess_evaluator.1} parent=0 // pred_check
    _
  $region11: #{chess_evaluator.1} parent=0 // pred_check_branch
    %17 = sbr.rel (0) target = $region13
  $region12: #{chess_evaluator.1} parent=0 // pred_region
    _
  $region13: #{chess_evaluator.1} parent=0 // pred_fallthru
    _
  // Predicated region
  $region14: #{chess_evaluator.1} parent=0 // pred_check
    _
  $region15: #{chess_evaluator.1} parent=0 // pred_check_branch
    %19 = sbr.rel (0) target = $region17
  $region16: #{chess_evaluator.1} parent=0 // pred_region
    _
  $region17: #{chess_evaluator.1} parent=0 // pred_fallthru
    _
  // Predicated region
  $region18: #{chess_evaluator.1} parent=0 // pred_check
    _
  $region19: #{chess_evaluator.1} parent=0 // pred_check_branch
    %21 = sbr.rel (0) target = $region21
  $region20: #{chess_evaluator.1} parent=0 // pred_region
    _
  $region21: #{chess_evaluator.1} parent=0 // pred_fallthru
    _
  %v23 = vld [vmem:[%s0] sm:$0x3f]
  %v24 = vld [vmem:[%s0 + $0x6] sm:$0x3f]
  %v25 = vld [vmem:[%s0 + $0xc] sm:$0x3f]
  %v26 = vld [vmem:[%s0 + $0x12] sm:$0x3f]
  %v27 = vld [vmem:[%s0 + $0x18] sm:$0x3f]
  %v28 = vld [vmem:[%s0 + $0x1e] sm:$0x3f]
  %v29 = vld [vmem:[%s0 + $0x24] sm:$0x3f]
  %v30 = vld [vmem:[%s0 + $0x2a] sm:$0x3f]
  %v31 = vld [vmem:[%s0 + $0x30] sm:$0x3f]
  %v32 = vld [vmem:[%s0 + $0x36] sm:$0x3f]
  %v33 = vld [vmem:[%s0 + $0x3c] sm:$0x3f]
  %v34 = vld [vmem:[%s0 + $0x42] sm:$0x3f]
  %v35 = vld [vmem:[%s0 + $0x48] sm:$0x3f]
  %v36 = vld [vmem:[%s0 + $0x4e] sm:$0x3f]
  %v37 = vld [vmem:[%s0 + $0x54] sm:$0x3f]
  %v38 = vld [vmem:[%s0 + $0x5a] sm:$0x3f]
  %v39 = vld [vmem:[%s0 + $0x60] sm:$0x3f]
  %v40 = vld [vmem:[%s0 + $0x66] sm:$0x3f]
  %v41 = vld [vmem:[%s0 + $0x6c] sm:$0x3f]
  %v42 = vld [vmem:[%s0 + $0x72] sm:$0x3f]
  %v43 = vld [vmem:[%s0 + $0x78] sm:$0x3f]
  %v44 = vld [vmem:[%s0 + $0x7e] sm:$0x3f]
  %v45 = vld [vmem:[%s0 + $0x84] sm:$0x3f]
  %v46 = vld [vmem:[%s0 + $0x8a] sm:$0x3f]
  %v47 = vld [vmem:[%s0 + $0x90] sm:$0x3f]
  %v48 = vld [vmem:[%s0 + $0x96] sm:$0x3f]
  %v49 = vld [vmem:[%s0 + $0x9c] sm:$0x3f]
  %v50 = vld [vmem:[%s0 + $0xa2] sm:$0x3f]
  %v51 = vld [vmem:[%s0 + $0xa8] sm:$0x3f]
  %v52 = vld [vmem:[%s0 + $0xae] sm:$0x3f]
  %v53 = vld [vmem:[%s0 + $0xb4] sm:$0x3f]
  %v54 = vld [vmem:[%s0 + $0xba] sm:$0x3f]
  %v55 = vld [vmem:[%s0 + $0xc0] sm:$0x3f]
  %v56 = vld [vmem:[%s0 + $0xc6] sm:$0x3f]
  %v57 = vld [vmem:[%s0 + $0xcc] sm:$0x3f]
  %v58 = vld [vmem:[%s0 + $0xd2] sm:$0x3f]
  %v59 = vld [vmem:[%s0 + $0xd8] sm:$0x3f]
  %v60 = vld [vmem:[%s0 + $0xde] sm:$0x3f]
  %v61 = vld [vmem:[%s0 + $0xe4] sm:$0x3f]
  %v62 = vld [vmem:[%s0 + $0xea] sm:$0x3f]
  %v63 = vld [vmem:[%s0 + $0xf0] sm:$0x3f]
  %v64 = vld [vmem:[%s0 + $0xf6] sm:$0x3f]
  %v65 = vld [vmem:[%s0 + $0xfc] sm:$0x3f]
  %v66 = vld [vmem:[%s0 + $0x102] sm:$0x3f]
  %v67 = vld [vmem:[%s0 + $0x108] sm:$0x3f]
  %v68 = vld [vmem:[%s0 + $0x10e] sm:$0x3f]
  %v69 = vld [vmem:[%s0 + $0x114] sm:$0x3f]
  %v70 = vld [vmem:[%s0 + $0x11a] sm:$0x3f]
  %v71 = vld [vmem:[%s0 + $0x120] sm:$0x3f]
  %v72 = vld [vmem:[%s0 + $0x126] sm:$0x3f]
  %v73 = vld [vmem:[%s0 + $0x12c] sm:$0x3f]
  %v74 = vld [vmem:[%s0 + $0x132] sm:$0x3f]
  %v75 = vld [vmem:[%s0 + $0x138] sm:$0x3f]
  %v76 = vld [vmem:[%s0 + $0x13e] sm:$0x3f]
  %v77 = vld [vmem:[%s0 + $0x144] sm:$0x3f]
  %v78 = vld [vmem:[%s0 + $0x14a] sm:$0x3f]
  %v79 = vld [vmem:[%s0 + $0x150] sm:$0x3f]
  %v80 = vld [vmem:[%s0 + $0x156] sm:$0x3f]
  %v81 = vld [vmem:[%s0 + $0x15c] sm:$0x3f]
  %v82 = vld [vmem:[%s0 + $0x162] sm:$0x3f]
  %v83 = vld [vmem:[%s0 + $0x168] sm:$0x3f]
  %v84 = vld [vmem:[%s0 + $0x16e] sm:$0x3f]
  %v85 = vld [vmem:[%s0 + $0x174] sm:$0x3f]
  %v86 = vld [vmem:[%s0 + $0x17a] sm:$0x3f]
  %v87 = vld [vmem:[%s1] sm:$0xf]
  %v88 = vld [vmem:[%s1 + $0x4] sm:$0xf]
  %v89 = vld [vmem:[%s1 + $0x8] sm:$0xf]
  %v90 = vld [vmem:[%s1 + $0xc] sm:$0xf]
  %v91 = vld [vmem:[%s1 + $0x10] sm:$0xf]
  %v92 = vld [vmem:[%s1 + $0x14] sm:$0xf]
  %v93 = vld [vmem:[%s1 + $0x18] sm:$0xf]
  %v94 = vld [vmem:[%s1 + $0x1c] sm:$0xf]
  %v95 = vld [vmem:[%s1 + $0x20] sm:$0xf]
  %v96 = vld [vmem:[%s1 + $0x24] sm:$0xf]
  %v97 = vld [vmem:[%s1 + $0x28] sm:$0xf]
  %v98 = vld [vmem:[%s1 + $0x2c] sm:$0xf]
  %v99 = vld [vmem:[%s1 + $0x30] sm:$0xf]
  %v100 = vld [vmem:[%s1 + $0x34] sm:$0xf]
  %v101 = vld [vmem:[%s1 + $0x38] sm:$0xf]
  %v102 = vld [vmem:[%s1 + $0x3c] sm:$0xf]
  %v103 = vld [vmem:[%s1 + $0x40] sm:$0xf]
  %v104 = vld [vmem:[%s1 + $0x44] sm:$0xf]
  %v105 = vld [vmem:[%s1 + $0x48] sm:$0xf]
  %v106 = vld [vmem:[%s1 + $0x4c] sm:$0xf]
  %v107 = vld [vmem:[%s1 + $0x50] sm:$0xf]
  %v108 = vld [vmem:[%s1 + $0x54] sm:$0xf]
  %v109 = vld [vmem:[%s1 + $0x58] sm:$0xf]
  %v110 = vld [vmem:[%s1 + $0x5c] sm:$0xf]
  %v111 = vld [vmem:[%s1 + $0x60] sm:$0xf]
  %v112 = vld [vmem:[%s1 + $0x64] sm:$0xf]
  %v113 = vld [vmem:[%s1 + $0x68] sm:$0xf]
  %v114 = vld [vmem:[%s1 + $0x6c] sm:$0xf]
  %v115 = vld [vmem:[%s1 + $0x70] sm:$0xf]
  %v116 = vld [vmem:[%s1 + $0x74] sm:$0xf]
  %v117 = vld [vmem:[%s1 + $0x78] sm:$0xf]
  %v118 = vld [vmem:[%s1 + $0x7c] sm:$0xf]
  %v119 = vld [vmem:[%s1 + $0x80] sm:$0xf]
  %v120 = vld [vmem:[%s1 + $0x84] sm:$0xf]
  %v121 = vld [vmem:[%s1 + $0x88] sm:$0xf]
  %v122 = vld [vmem:[%s1 + $0x8c] sm:$0xf]
  %v123 = vld [vmem:[%s1 + $0x90] sm:$0xf]
  %v124 = vld [vmem:[%s1 + $0x94] sm:$0xf]
  %v125 = vld [vmem:[%s1 + $0x98] sm:$0xf]
  %v126 = vld [vmem:[%s1 + $0x9c] sm:$0xf]
  %v127 = vld [vmem:[%s1 + $0xa0] sm:$0xf]
  %v128 = vld [vmem:[%s1 + $0xa4] sm:$0xf]
  %v129 = vld [vmem:[%s1 + $0xa8] sm:$0xf]
  %v130 = vld [vmem:[%s1 + $0xac] sm:$0xf]
  %v131 = vld [vmem:[%s1 + $0xb0] sm:$0xf]
  %v132 = vld [vmem:[%s1 + $0xb4] sm:$0xf]
  %v133 = vld [vmem:[%s1 + $0xb8] sm:$0xf]
  %v134 = vld [vmem:[%s1 + $0xbc] sm:$0xf]
  %v135 = vld [vmem:[%s1 + $0xc0] sm:$0xf]
  %v136 = vld [vmem:[%s1 + $0xc4] sm:$0xf]
  %v137 = vld [vmem:[%s1 + $0xc8] sm:$0xf]
  %v138 = vld [vmem:[%s1 + $0xcc] sm:$0xf]
  %v139 = vld [vmem:[%s1 + $0xd0] sm:$0xf]
  %v140 = vld [vmem:[%s1 + $0xd4] sm:$0xf]
  %v141 = vld [vmem:[%s1 + $0xd8] sm:$0xf]
  %v142 = vld [vmem:[%s1 + $0xdc] sm:$0xf]
  %v143 = vld [vmem:[%s1 + $0xe0] sm:$0xf]
  %v144 = vld [vmem:[%s1 + $0xe4] sm:$0xf]
  %v145 = vld [vmem:[%s1 + $0xe8] sm:$0xf]
  %v146 = vld [vmem:[%s1 + $0xec] sm:$0xf]
  %v147 = vld [vmem:[%s1 + $0xf0] sm:$0xf]
  %v148 = vld [vmem:[%s1 + $0xf4] sm:$0xf]
  %v149 = vld [vmem:[%s1 + $0xf8] sm:$0xf]
  %v150 = vld [vmem:[%s1 + $0xfc] sm:$0xf]
  %v151 = vld [vmem:[%s1 + $0x100] sm:$0xf]
  %v152 = vld [vmem:[%s1 + $0x104] sm:$0xf]
  %v153 = vld [vmem:[%s1 + $0x108] sm:$0xf]
  %v154 = vld [vmem:[%s1 + $0x10c] sm:$0xf]
  %v155 = vld [vmem:[%s1 + $0x110] sm:$0xf]
  %v156 = vld [vmem:[%s1 + $0x114] sm:$0xf]
  %v157 = vld [vmem:[%s1 + $0x118] sm:$0xf]
  %v158 = vld [vmem:[%s1 + $0x11c] sm:$0xf]
  %v159 = vld [vmem:[%s1 + $0x120] sm:$0xf]
  %v160 = vld [vmem:[%s1 + $0x124] sm:$0xf]
  %v161 = vld [vmem:[%s1 + $0x128] sm:$0xf]
  %v162 = vld [vmem:[%s1 + $0x12c] sm:$0xf]
  %v163 = vld [vmem:[%s1 + $0x130] sm:$0xf]
  %v164 = vld [vmem:[%s1 + $0x134] sm:$0xf]
  %v165 = vld [vmem:[%s1 + $0x138] sm:$0xf]
  %v166 = vld [vmem:[%s1 + $0x13c] sm:$0xf]
  %v167 = vld [vmem:[%s1 + $0x140] sm:$0xf]
  %v168 = vld [vmem:[%s1 + $0x144] sm:$0xf]
  %v169 = vld [vmem:[%s1 + $0x148] sm:$0xf]
  %v170 = vld [vmem:[%s1 + $0x14c] sm:$0xf]
  %v171 = vld [vmem:[%s1 + $0x150] sm:$0xf]
  %v172 = vld [vmem:[%s1 + $0x154] sm:$0xf]
  %v173 = vld [vmem:[%s1 + $0x158] sm:$0xf]
  %v174 = vld [vmem:[%s1 + $0x15c] sm:$0xf]
  %v175 = vld [vmem:[%s1 + $0x160] sm:$0xf]
  %v176 = vld [vmem:[%s1 + $0x164] sm:$0xf]
  %v177 = vld [vmem:[%s1 + $0x168] sm:$0xf]
  %v178 = vld [vmem:[%s1 + $0x16c] sm:$0xf]
  %v179 = vld [vmem:[%s1 + $0x170] sm:$0xf]
  %v180 = vld [vmem:[%s1 + $0x174] sm:$0xf]
  %v181 = vld [vmem:[%s1 + $0x178] sm:$0xf]
  %v182 = vld [vmem:[%s1 + $0x17c] sm:$0xf]
  %v183 = vld [vmem:[%s2] sm:$0x1]
  %v185 = vlaneseq
  %v186 = vshrl.u32 %v185, 7
  %v187 = vsub.s32 0, %v186
  %v188 = vrot.slane %v183, %v187
  %v254 = vcombine.low %v23, %v24
  %v255 = vcombine.high %v23, %v24
  %v256 = vcombine.low %v25, %v26
  %v257 = vcombine.high %v25, %v26
  %v258 = vcombine.low %v27, %v28
  %v259 = vcombine.high %v27, %v28
  %v260 = vcombine.low %v29, %v30
  %v261 = vcombine.high %v29, %v30
  %v263 = vunpack.c.l.s4 1966171168
  %v264 = vunpack.c.0.s8 %v263
  %v265 = vlaneseq
  %v266 = vshrl.u32 %v265, 7
  %v267 = vsub.s32 %v264, %v266
  %v268 = vrot.slane %v254, %v267
  %v270 = vunpack.c.l.s4 1966171168
  %v271 = vunpack.c.0.s8 %v270
  %v272 = vlaneseq
  %v273 = vshrl.u32 %v272, 7
  %v274 = vsub.s32 %v271, %v273
  %v275 = vrot.slane %v255, %v274
  %v277 = vunpack.c.l.s4 1966171168
  %v278 = vunpack.c.0.s8 %v277
  %v279 = vlaneseq
  %v280 = vshrl.u32 %v279, 7
  %v281 = vsub.s32 %v278, %v280
  %v282 = vrot.slane %v256, %v281
  %v284 = vunpack.c.l.s4 1966171168
  %v285 = vunpack.c.0.s8 %v284
  %v286 = vlaneseq
  %v287 = vshrl.u32 %v286, 7
  %v288 = vsub.s32 %v285, %v287
  %v289 = vrot.slane %v257, %v288
  %v291 = vunpack.c.l.s4 1966171168
  %v292 = vunpack.c.0.s8 %v291
  %v293 = vlaneseq
  %v294 = vshrl.u32 %v293, 7
  %v295 = vsub.s32 %v292, %v294
  %v296 = vrot.slane %v258, %v295
  %v298 = vunpack.c.l.s4 1966171168
  %v299 = vunpack.c.0.s8 %v298
  %v300 = vlaneseq
  %v301 = vshrl.u32 %v300, 7
  %v302 = vsub.s32 %v299, %v301
  %v303 = vrot.slane %v259, %v302
  %v305 = vunpack.c.l.s4 1966171168
  %v306 = vunpack.c.0.s8 %v305
  %v307 = vlaneseq
  %v308 = vshrl.u32 %v307, 7
  %v309 = vsub.s32 %v306, %v308
  %v310 = vrot.slane %v260, %v309
  %v312 = vunpack.c.l.s4 1966171168
  %v313 = vunpack.c.0.s8 %v312
  %v314 = vlaneseq
  %v315 = vshrl.u32 %v314, 7
  %v316 = vsub.s32 %v313, %v315
  %v317 = vrot.slane %v261, %v316
  %v318 = vcombine.low %v268, %v282
  %v319 = vcombine.high %v268, %v282
  %v320 = vcombine.low %v275, %v289
  %v321 = vcombine.high %v275, %v289
  %v322 = vcombine.low %v296, %v310
  %v323 = vcombine.high %v296, %v310
  %v324 = vcombine.low %v303, %v317
  %v325 = vcombine.high %v303, %v317
  %v327 = vunpack.c.l.s4 1966171168
  %v328 = vunpack.c.0.s8 %v327
  %v329 = vlaneseq
  %v330 = vshrl.u32 %v329, 7
  %v331 = vsub.s32 %v328, %v330
  %v332 = vrot.slane %v318, %v331
  %v334 = vunpack.c.l.s4 1966171168
  %v335 = vunpack.c.0.s8 %v334
  %v336 = vlaneseq
  %v337 = vshrl.u32 %v336, 7
  %v338 = vsub.s32 %v335, %v337
  %v339 = vrot.slane %v320, %v338
  %v341 = vunpack.c.l.s4 1966171168
  %v342 = vunpack.c.0.s8 %v341
  %v343 = vlaneseq
  %v344 = vshrl.u32 %v343, 7
  %v345 = vsub.s32 %v342, %v344
  %v346 = vrot.slane %v319, %v345
  %v348 = vunpack.c.l.s4 1966171168
  %v349 = vunpack.c.0.s8 %v348
  %v350 = vlaneseq
  %v351 = vshrl.u32 %v350, 7
  %v352 = vsub.s32 %v349, %v351
  %v353 = vrot.slane %v321, %v352
  %v355 = vunpack.c.l.s4 1966171168
  %v356 = vunpack.c.0.s8 %v355
  %v357 = vlaneseq
  %v358 = vshrl.u32 %v357, 7
  %v359 = vsub.s32 %v356, %v358
  %v360 = vrot.slane %v322, %v359
  %v362 = vunpack.c.l.s4 1966171168
  %v363 = vunpack.c.0.s8 %v362
  %v364 = vlaneseq
  %v365 = vshrl.u32 %v364, 7
  %v366 = vsub.s32 %v363, %v365
  %v367 = vrot.slane %v324, %v366
  %v369 = vunpack.c.l.s4 1966171168
  %v370 = vunpack.c.0.s8 %v369
  %v371 = vlaneseq
  %v372 = vshrl.u32 %v371, 7
  %v373 = vsub.s32 %v370, %v372
  %v374 = vrot.slane %v323, %v373
  %v376 = vunpack.c.l.s4 1966171168
  %v377 = vunpack.c.0.s8 %v376
  %v378 = vlaneseq
  %v379 = vshrl.u32 %v378, 7
  %v380 = vsub.s32 %v377, %v379
  %v381 = vrot.slane %v325, %v380
  %v382 = vcombine.low %v332, %v360
  %v383 = vcombine.high %v332, %v360
  %v384 = vcombine.low %v339, %v367
  %v385 = vcombine.low %v346, %v374
  %v386 = vcombine.high %v346, %v374
  %v387 = vcombine.low %v353, %v381
  %v388 = vcombine.low %v31, %v32
  %v389 = vcombine.high %v31, %v32
  %v390 = vcombine.low %v33, %v34
  %v391 = vcombine.high %v33, %v34
  %v392 = vcombine.low %v35, %v36
  %v393 = vcombine.high %v35, %v36
  %v394 = vcombine.low %v37, %v38
  %v395 = vcombine.high %v37, %v38
  %v397 = vunpack.c.l.s4 1966171168
  %v398 = vunpack.c.0.s8 %v397
  %v399 = vlaneseq
  %v400 = vshrl.u32 %v399, 7
  %v401 = vsub.s32 %v398, %v400
  %v402 = vrot.slane %v388, %v401
  %v404 = vunpack.c.l.s4 1966171168
  %v405 = vunpack.c.0.s8 %v404
  %v406 = vlaneseq
  %v407 = vshrl.u32 %v406, 7
  %v408 = vsub.s32 %v405, %v407
  %v409 = vrot.slane %v389, %v408
  %v411 = vunpack.c.l.s4 1966171168
  %v412 = vunpack.c.0.s8 %v411
  %v413 = vlaneseq
  %v414 = vshrl.u32 %v413, 7
  %v415 = vsub.s32 %v412, %v414
  %v416 = vrot.slane %v390, %v415
  %v418 = vunpack.c.l.s4 1966171168
  %v419 = vunpack.c.0.s8 %v418
  %v420 = vlaneseq
  %v421 = vshrl.u32 %v420, 7
  %v422 = vsub.s32 %v419, %v421
  %v423 = vrot.slane %v391, %v422
  %v425 = vunpack.c.l.s4 1966171168
  %v426 = vunpack.c.0.s8 %v425
  %v427 = vlaneseq
  %v428 = vshrl.u32 %v427, 7
  %v429 = vsub.s32 %v426, %v428
  %v430 = vrot.slane %v392, %v429
  %v432 = vunpack.c.l.s4 1966171168
  %v433 = vunpack.c.0.s8 %v432
  %v434 = vlaneseq
  %v435 = vshrl.u32 %v434, 7
  %v436 = vsub.s32 %v433, %v435
  %v437 = vrot.slane %v393, %v436
  %v439 = vunpack.c.l.s4 1966171168
  %v440 = vunpack.c.0.s8 %v439
  %v441 = vlaneseq
  %v442 = vshrl.u32 %v441, 7
  %v443 = vsub.s32 %v440, %v442
  %v444 = vrot.slane %v394, %v443
  %v446 = vunpack.c.l.s4 1966171168
  %v447 = vunpack.c.0.s8 %v446
  %v448 = vlaneseq
  %v449 = vshrl.u32 %v448, 7
  %v450 = vsub.s32 %v447, %v449
  %v451 = vrot.slane %v395, %v450
  %v452 = vcombine.low %v402, %v416
  %v453 = vcombine.high %v402, %v416
  %v454 = vcombine.low %v409, %v423
  %v455 = vcombine.high %v409, %v423
  %v456 = vcombine.low %v430, %v444
  %v457 = vcombine.high %v430, %v444
  %v458 = vcombine.low %v437, %v451
  %v459 = vcombine.high %v437, %v451
  %v461 = vunpack.c.l.s4 1966171168
  %v462 = vunpack.c.0.s8 %v461
  %v463 = vlaneseq
  %v464 = vshrl.u32 %v463, 7
  %v465 = vsub.s32 %v462, %v464
  %v466 = vrot.slane %v452, %v465
  %v468 = vunpack.c.l.s4 1966171168
  %v469 = vunpack.c.0.s8 %v468
  %v470 = vlaneseq
  %v471 = vshrl.u32 %v470, 7
  %v472 = vsub.s32 %v469, %v471
  %v473 = vrot.slane %v454, %v472
  %v475 = vunpack.c.l.s4 1966171168
  %v476 = vunpack.c.0.s8 %v475
  %v477 = vlaneseq
  %v478 = vshrl.u32 %v477, 7
  %v479 = vsub.s32 %v476, %v478
  %v480 = vrot.slane %v453, %v479
  %v482 = vunpack.c.l.s4 1966171168
  %v483 = vunpack.c.0.s8 %v482
  %v484 = vlaneseq
  %v485 = vshrl.u32 %v484, 7
  %v486 = vsub.s32 %v483, %v485
  %v487 = vrot.slane %v455, %v486
  %v489 = vunpack.c.l.s4 1966171168
  %v490 = vunpack.c.0.s8 %v489
  %v491 = vlaneseq
  %v492 = vshrl.u32 %v491, 7
  %v493 = vsub.s32 %v490, %v492
  %v494 = vrot.slane %v456, %v493
  %v496 = vunpack.c.l.s4 1966171168
  %v497 = vunpack.c.0.s8 %v496
  %v498 = vlaneseq
  %v499 = vshrl.u32 %v498, 7
  %v500 = vsub.s32 %v497, %v499
  %v501 = vrot.slane %v458, %v500
  %v503 = vunpack.c.l.s4 1966171168
  %v504 = vunpack.c.0.s8 %v503
  %v505 = vlaneseq
  %v506 = vshrl.u32 %v505, 7
  %v507 = vsub.s32 %v504, %v506
  %v508 = vrot.slane %v457, %v507
  %v510 = vunpack.c.l.s4 1966171168
  %v511 = vunpack.c.0.s8 %v510
  %v512 = vlaneseq
  %v513 = vshrl.u32 %v512, 7
  %v514 = vsub.s32 %v511, %v513
  %v515 = vrot.slane %v459, %v514
  %v516 = vcombine.low %v466, %v494
  %v517 = vcombine.high %v466, %v494
  %v518 = vcombine.low %v473, %v501
  %v519 = vcombine.low %v480, %v508
  %v520 = vcombine.high %v480, %v508
  %v521 = vcombine.low %v487, %v515
  %v522 = vcombine.low %v39, %v40
  %v523 = vcombine.high %v39, %v40
  %v524 = vcombine.low %v41, %v42
  %v525 = vcombine.high %v41, %v42
  %v526 = vcombine.low %v43, %v44
  %v527 = vcombine.high %v43, %v44
  %v528 = vcombine.low %v45, %v46
  %v529 = vcombine.high %v45, %v46
  %v531 = vunpack.c.l.s4 1966171168
  %v532 = vunpack.c.0.s8 %v531
  %v533 = vlaneseq
  %v534 = vshrl.u32 %v533, 7
  %v535 = vsub.s32 %v532, %v534
  %v536 = vrot.slane %v522, %v535
  %v538 = vunpack.c.l.s4 1966171168
  %v539 = vunpack.c.0.s8 %v538
  %v540 = vlaneseq
  %v541 = vshrl.u32 %v540, 7
  %v542 = vsub.s32 %v539, %v541
  %v543 = vrot.slane %v523, %v542
  %v545 = vunpack.c.l.s4 1966171168
  %v546 = vunpack.c.0.s8 %v545
  %v547 = vlaneseq
  %v548 = vshrl.u32 %v547, 7
  %v549 = vsub.s32 %v546, %v548
  %v550 = vrot.slane %v524, %v549
  %v552 = vunpack.c.l.s4 1966171168
  %v553 = vunpack.c.0.s8 %v552
  %v554 = vlaneseq
  %v555 = vshrl.u32 %v554, 7
  %v556 = vsub.s32 %v553, %v555
  %v557 = vrot.slane %v525, %v556
  %v559 = vunpack.c.l.s4 1966171168
  %v560 = vunpack.c.0.s8 %v559
  %v561 = vlaneseq
  %v562 = vshrl.u32 %v561, 7
  %v563 = vsub.s32 %v560, %v562
  %v564 = vrot.slane %v526, %v563
  %v566 = vunpack.c.l.s4 1966171168
  %v567 = vunpack.c.0.s8 %v566
  %v568 = vlaneseq
  %v569 = vshrl.u32 %v568, 7
  %v570 = vsub.s32 %v567, %v569
  %v571 = vrot.slane %v527, %v570
  %v573 = vunpack.c.l.s4 1966171168
  %v574 = vunpack.c.0.s8 %v573
  %v575 = vlaneseq
  %v576 = vshrl.u32 %v575, 7
  %v577 = vsub.s32 %v574, %v576
  %v578 = vrot.slane %v528, %v577
  %v580 = vunpack.c.l.s4 1966171168
  %v581 = vunpack.c.0.s8 %v580
  %v582 = vlaneseq
  %v583 = vshrl.u32 %v582, 7
  %v584 = vsub.s32 %v581, %v583
  %v585 = vrot.slane %v529, %v584
  %v586 = vcombine.low %v536, %v550
  %v587 = vcombine.high %v536, %v550
  %v588 = vcombine.low %v543, %v557
  %v589 = vcombine.high %v543, %v557
  %v590 = vcombine.low %v564, %v578
  %v591 = vcombine.high %v564, %v578
  %v592 = vcombine.low %v571, %v585
  %v593 = vcombine.high %v571, %v585
  %v595 = vunpack.c.l.s4 1966171168
  %v596 = vunpack.c.0.s8 %v595
  %v597 = vlaneseq
  %v598 = vshrl.u32 %v597, 7
  %v599 = vsub.s32 %v596, %v598
  %v600 = vrot.slane %v586, %v599
  %v602 = vunpack.c.l.s4 1966171168
  %v603 = vunpack.c.0.s8 %v602
  %v604 = vlaneseq
  %v605 = vshrl.u32 %v604, 7
  %v606 = vsub.s32 %v603, %v605
  %v607 = vrot.slane %v588, %v606
  %v609 = vunpack.c.l.s4 1966171168
  %v610 = vunpack.c.0.s8 %v609
  %v611 = vlaneseq
  %v612 = vshrl.u32 %v611, 7
  %v613 = vsub.s32 %v610, %v612
  %v614 = vrot.slane %v587, %v613
  %v616 = vunpack.c.l.s4 1966171168
  %v617 = vunpack.c.0.s8 %v616
  %v618 = vlaneseq
  %v619 = vshrl.u32 %v618, 7
  %v620 = vsub.s32 %v617, %v619
  %v621 = vrot.slane %v589, %v620
  %v623 = vunpack.c.l.s4 1966171168
  %v624 = vunpack.c.0.s8 %v623
  %v625 = vlaneseq
  %v626 = vshrl.u32 %v625, 7
  %v627 = vsub.s32 %v624, %v626
  %v628 = vrot.slane %v590, %v627
  %v630 = vunpack.c.l.s4 1966171168
  %v631 = vunpack.c.0.s8 %v630
  %v632 = vlaneseq
  %v633 = vshrl.u32 %v632, 7
  %v634 = vsub.s32 %v631, %v633
  %v635 = vrot.slane %v592, %v634
  %v637 = vunpack.c.l.s4 1966171168
  %v638 = vunpack.c.0.s8 %v637
  %v639 = vlaneseq
  %v640 = vshrl.u32 %v639, 7
  %v641 = vsub.s32 %v638, %v640
  %v642 = vrot.slane %v591, %v641
  %v644 = vunpack.c.l.s4 1966171168
  %v645 = vunpack.c.0.s8 %v644
  %v646 = vlaneseq
  %v647 = vshrl.u32 %v646, 7
  %v648 = vsub.s32 %v645, %v647
  %v649 = vrot.slane %v593, %v648
  %v650 = vcombine.low %v600, %v628
  %v651 = vcombine.high %v600, %v628
  %v652 = vcombine.low %v607, %v635
  %v653 = vcombine.low %v614, %v642
  %v654 = vcombine.high %v614, %v642
  %v655 = vcombine.low %v621, %v649
  %v656 = vcombine.low %v47, %v48
  %v657 = vcombine.high %v47, %v48
  %v658 = vcombine.low %v49, %v50
  %v659 = vcombine.high %v49, %v50
  %v660 = vcombine.low %v51, %v52
  %v661 = vcombine.high %v51, %v52
  %v662 = vcombine.low %v53, %v54
  %v663 = vcombine.high %v53, %v54
  %v665 = vunpack.c.l.s4 1966171168
  %v666 = vunpack.c.0.s8 %v665
  %v667 = vlaneseq
  %v668 = vshrl.u32 %v667, 7
  %v669 = vsub.s32 %v666, %v668
  %v670 = vrot.slane %v656, %v669
  %v672 = vunpack.c.l.s4 1966171168
  %v673 = vunpack.c.0.s8 %v672
  %v674 = vlaneseq
  %v675 = vshrl.u32 %v674, 7
  %v676 = vsub.s32 %v673, %v675
  %v677 = vrot.slane %v657, %v676
  %v679 = vunpack.c.l.s4 1966171168
  %v680 = vunpack.c.0.s8 %v679
  %v681 = vlaneseq
  %v682 = vshrl.u32 %v681, 7
  %v683 = vsub.s32 %v680, %v682
  %v684 = vrot.slane %v658, %v683
  %v686 = vunpack.c.l.s4 1966171168
  %v687 = vunpack.c.0.s8 %v686
  %v688 = vlaneseq
  %v689 = vshrl.u32 %v688, 7
  %v690 = vsub.s32 %v687, %v689
  %v691 = vrot.slane %v659, %v690
  %v693 = vunpack.c.l.s4 1966171168
  %v694 = vunpack.c.0.s8 %v693
  %v695 = vlaneseq
  %v696 = vshrl.u32 %v695, 7
  %v697 = vsub.s32 %v694, %v696
  %v698 = vrot.slane %v660, %v697
  %v700 = vunpack.c.l.s4 1966171168
  %v701 = vunpack.c.0.s8 %v700
  %v702 = vlaneseq
  %v703 = vshrl.u32 %v702, 7
  %v704 = vsub.s32 %v701, %v703
  %v705 = vrot.slane %v661, %v704
  %v707 = vunpack.c.l.s4 1966171168
  %v708 = vunpack.c.0.s8 %v707
  %v709 = vlaneseq
  %v710 = vshrl.u32 %v709, 7
  %v711 = vsub.s32 %v708, %v710
  %v712 = vrot.slane %v662, %v711
  %v714 = vunpack.c.l.s4 1966171168
  %v715 = vunpack.c.0.s8 %v714
  %v716 = vlaneseq
  %v717 = vshrl.u32 %v716, 7
  %v718 = vsub.s32 %v715, %v717
  %v719 = vrot.slane %v663, %v718
  %v720 = vcombine.low %v670, %v684
  %v721 = vcombine.high %v670, %v684
  %v722 = vcombine.low %v677, %v691
  %v723 = vcombine.high %v677, %v691
  %v724 = vcombine.low %v698, %v712
  %v725 = vcombine.high %v698, %v712
  %v726 = vcombine.low %v705, %v719
  %v727 = vcombine.high %v705, %v719
  %v729 = vunpack.c.l.s4 1966171168
  %v730 = vunpack.c.0.s8 %v729
  %v731 = vlaneseq
  %v732 = vshrl.u32 %v731, 7
  %v733 = vsub.s32 %v730, %v732
  %v734 = vrot.slane %v720, %v733
  %v736 = vunpack.c.l.s4 1966171168
  %v737 = vunpack.c.0.s8 %v736
  %v738 = vlaneseq
  %v739 = vshrl.u32 %v738, 7
  %v740 = vsub.s32 %v737, %v739
  %v741 = vrot.slane %v722, %v740
  %v743 = vunpack.c.l.s4 1966171168
  %v744 = vunpack.c.0.s8 %v743
  %v745 = vlaneseq
  %v746 = vshrl.u32 %v745, 7
  %v747 = vsub.s32 %v744, %v746
  %v748 = vrot.slane %v721, %v747
  %v750 = vunpack.c.l.s4 1966171168
  %v751 = vunpack.c.0.s8 %v750
  %v752 = vlaneseq
  %v753 = vshrl.u32 %v752, 7
  %v754 = vsub.s32 %v751, %v753
  %v755 = vrot.slane %v723, %v754
  %v757 = vunpack.c.l.s4 1966171168
  %v758 = vunpack.c.0.s8 %v757
  %v759 = vlaneseq
  %v760 = vshrl.u32 %v759, 7
  %v761 = vsub.s32 %v758, %v760
  %v762 = vrot.slane %v724, %v761
  %v764 = vunpack.c.l.s4 1966171168
  %v765 = vunpack.c.0.s8 %v764
  %v766 = vlaneseq
  %v767 = vshrl.u32 %v766, 7
  %v768 = vsub.s32 %v765, %v767
  %v769 = vrot.slane %v726, %v768
  %v771 = vunpack.c.l.s4 1966171168
  %v772 = vunpack.c.0.s8 %v771
  %v773 = vlaneseq
  %v774 = vshrl.u32 %v773, 7
  %v775 = vsub.s32 %v772, %v774
  %v776 = vrot.slane %v725, %v775
  %v778 = vunpack.c.l.s4 1966171168
  %v779 = vunpack.c.0.s8 %v778
  %v780 = vlaneseq
  %v781 = vshrl.u32 %v780, 7
  %v782 = vsub.s32 %v779, %v781
  %v783 = vrot.slane %v727, %v782
  %v784 = vcombine.low %v734, %v762
  %v785 = vcombine.high %v734, %v762
  %v786 = vcombine.low %v741, %v769
  %v787 = vcombine.low %v748, %v776
  %v788 = vcombine.high %v748, %v776
  %v789 = vcombine.low %v755, %v783
  %v790 = vcombine.low %v55, %v56
  %v791 = vcombine.high %v55, %v56
  %v792 = vcombine.low %v57, %v58
  %v793 = vcombine.high %v57, %v58
  %v794 = vcombine.low %v59, %v60
  %v795 = vcombine.high %v59, %v60
  %v796 = vcombine.low %v61, %v62
  %v797 = vcombine.high %v61, %v62
  %v799 = vunpack.c.l.s4 1966171168
  %v800 = vunpack.c.0.s8 %v799
  %v801 = vlaneseq
  %v802 = vshrl.u32 %v801, 7
  %v803 = vsub.s32 %v800, %v802
  %v804 = vrot.slane %v790, %v803
  %v806 = vunpack.c.l.s4 1966171168
  %v807 = vunpack.c.0.s8 %v806
  %v808 = vlaneseq
  %v809 = vshrl.u32 %v808, 7
  %v810 = vsub.s32 %v807, %v809
  %v811 = vrot.slane %v791, %v810
  %v813 = vunpack.c.l.s4 1966171168
  %v814 = vunpack.c.0.s8 %v813
  %v815 = vlaneseq
  %v816 = vshrl.u32 %v815, 7
  %v817 = vsub.s32 %v814, %v816
  %v818 = vrot.slane %v792, %v817
  %v820 = vunpack.c.l.s4 1966171168
  %v821 = vunpack.c.0.s8 %v820
  %v822 = vlaneseq
  %v823 = vshrl.u32 %v822, 7
  %v824 = vsub.s32 %v821, %v823
  %v825 = vrot.slane %v793, %v824
  %v827 = vunpack.c.l.s4 1966171168
  %v828 = vunpack.c.0.s8 %v827
  %v829 = vlaneseq
  %v830 = vshrl.u32 %v829, 7
  %v831 = vsub.s32 %v828, %v830
  %v832 = vrot.slane %v794, %v831
  %v834 = vunpack.c.l.s4 1966171168
  %v835 = vunpack.c.0.s8 %v834
  %v836 = vlaneseq
  %v837 = vshrl.u32 %v836, 7
  %v838 = vsub.s32 %v835, %v837
  %v839 = vrot.slane %v795, %v838
  %v841 = vunpack.c.l.s4 1966171168
  %v842 = vunpack.c.0.s8 %v841
  %v843 = vlaneseq
  %v844 = vshrl.u32 %v843, 7
  %v845 = vsub.s32 %v842, %v844
  %v846 = vrot.slane %v796, %v845
  %v848 = vunpack.c.l.s4 1966171168
  %v849 = vunpack.c.0.s8 %v848
  %v850 = vlaneseq
  %v851 = vshrl.u32 %v850, 7
  %v852 = vsub.s32 %v849, %v851
  %v853 = vrot.slane %v797, %v852
  %v854 = vcombine.low %v804, %v818
  %v855 = vcombine.high %v804, %v818
  %v856 = vcombine.low %v811, %v825
  %v857 = vcombine.high %v811, %v825
  %v858 = vcombine.low %v832, %v846
  %v859 = vcombine.high %v832, %v846
  %v860 = vcombine.low %v839, %v853
  %v861 = vcombine.high %v839, %v853
  %v863 = vunpack.c.l.s4 1966171168
  %v864 = vunpack.c.0.s8 %v863
  %v865 = vlaneseq
  %v866 = vshrl.u32 %v865, 7
  %v867 = vsub.s32 %v864, %v866
  %v868 = vrot.slane %v854, %v867
  %v870 = vunpack.c.l.s4 1966171168
  %v871 = vunpack.c.0.s8 %v870
  %v872 = vlaneseq
  %v873 = vshrl.u32 %v872, 7
  %v874 = vsub.s32 %v871, %v873
  %v875 = vrot.slane %v856, %v874
  %v877 = vunpack.c.l.s4 1966171168
  %v878 = vunpack.c.0.s8 %v877
  %v879 = vlaneseq
  %v880 = vshrl.u32 %v879, 7
  %v881 = vsub.s32 %v878, %v880
  %v882 = vrot.slane %v855, %v881
  %v884 = vunpack.c.l.s4 1966171168
  %v885 = vunpack.c.0.s8 %v884
  %v886 = vlaneseq
  %v887 = vshrl.u32 %v886, 7
  %v888 = vsub.s32 %v885, %v887
  %v889 = vrot.slane %v857, %v888
  %v891 = vunpack.c.l.s4 1966171168
  %v892 = vunpack.c.0.s8 %v891
  %v893 = vlaneseq
  %v894 = vshrl.u32 %v893, 7
  %v895 = vsub.s32 %v892, %v894
  %v896 = vrot.slane %v858, %v895
  %v898 = vunpack.c.l.s4 1966171168
  %v899 = vunpack.c.0.s8 %v898
  %v900 = vlaneseq
  %v901 = vshrl.u32 %v900, 7
  %v902 = vsub.s32 %v899, %v901
  %v903 = vrot.slane %v860, %v902
  %v905 = vunpack.c.l.s4 1966171168
  %v906 = vunpack.c.0.s8 %v905
  %v907 = vlaneseq
  %v908 = vshrl.u32 %v907, 7
  %v909 = vsub.s32 %v906, %v908
  %v910 = vrot.slane %v859, %v909
  %v912 = vunpack.c.l.s4 1966171168
  %v913 = vunpack.c.0.s8 %v912
  %v914 = vlaneseq
  %v915 = vshrl.u32 %v914, 7
  %v916 = vsub.s32 %v913, %v915
  %v917 = vrot.slane %v861, %v916
  %v918 = vcombine.low %v868, %v896
  %v919 = vcombine.high %v868, %v896
  %v920 = vcombine.low %v875, %v903
  %v921 = vcombine.low %v882, %v910
  %v922 = vcombine.high %v882, %v910
  %v923 = vcombine.low %v889, %v917
  %v924 = vcombine.low %v63, %v64
  %v925 = vcombine.high %v63, %v64
  %v926 = vcombine.low %v65, %v66
  %v927 = vcombine.high %v65, %v66
  %v928 = vcombine.low %v67, %v68
  %v929 = vcombine.high %v67, %v68
  %v930 = vcombine.low %v69, %v70
  %v931 = vcombine.high %v69, %v70
  %v933 = vunpack.c.l.s4 1966171168
  %v934 = vunpack.c.0.s8 %v933
  %v935 = vlaneseq
  %v936 = vshrl.u32 %v935, 7
  %v937 = vsub.s32 %v934, %v936
  %v938 = vrot.slane %v924, %v937
  %v940 = vunpack.c.l.s4 1966171168
  %v941 = vunpack.c.0.s8 %v940
  %v942 = vlaneseq
  %v943 = vshrl.u32 %v942, 7
  %v944 = vsub.s32 %v941, %v943
  %v945 = vrot.slane %v925, %v944
  %v947 = vunpack.c.l.s4 1966171168
  %v948 = vunpack.c.0.s8 %v947
  %v949 = vlaneseq
  %v950 = vshrl.u32 %v949, 7
  %v951 = vsub.s32 %v948, %v950
  %v952 = vrot.slane %v926, %v951
  %v954 = vunpack.c.l.s4 1966171168
  %v955 = vunpack.c.0.s8 %v954
  %v956 = vlaneseq
  %v957 = vshrl.u32 %v956, 7
  %v958 = vsub.s32 %v955, %v957
  %v959 = vrot.slane %v927, %v958
  %v961 = vunpack.c.l.s4 1966171168
  %v962 = vunpack.c.0.s8 %v961
  %v963 = vlaneseq
  %v964 = vshrl.u32 %v963, 7
  %v965 = vsub.s32 %v962, %v964
  %v966 = vrot.slane %v928, %v965
  %v968 = vunpack.c.l.s4 1966171168
  %v969 = vunpack.c.0.s8 %v968
  %v970 = vlaneseq
  %v971 = vshrl.u32 %v970, 7
  %v972 = vsub.s32 %v969, %v971
  %v973 = vrot.slane %v929, %v972
  %v975 = vunpack.c.l.s4 1966171168
  %v976 = vunpack.c.0.s8 %v975
  %v977 = vlaneseq
  %v978 = vshrl.u32 %v977, 7
  %v979 = vsub.s32 %v976, %v978
  %v980 = vrot.slane %v930, %v979
  %v982 = vunpack.c.l.s4 1966171168
  %v983 = vunpack.c.0.s8 %v982
  %v984 = vlaneseq
  %v985 = vshrl.u32 %v984, 7
  %v986 = vsub.s32 %v983, %v985
  %v987 = vrot.slane %v931, %v986
  %v988 = vcombine.low %v938, %v952
  %v989 = vcombine.high %v938, %v952
  %v990 = vcombine.low %v945, %v959
  %v991 = vcombine.high %v945, %v959
  %v992 = vcombine.low %v966, %v980
  %v993 = vcombine.high %v966, %v980
  %v994 = vcombine.low %v973, %v987
  %v995 = vcombine.high %v973, %v987
  %v997 = vunpack.c.l.s4 1966171168
  %v998 = vunpack.c.0.s8 %v997
  %v999 = vlaneseq
  %v1000 = vshrl.u32 %v999, 7
  %v1001 = vsub.s32 %v998, %v1000
  %v1002 = vrot.slane %v988, %v1001
  %v1004 = vunpack.c.l.s4 1966171168
  %v1005 = vunpack.c.0.s8 %v1004
  %v1006 = vlaneseq
  %v1007 = vshrl.u32 %v1006, 7
  %v1008 = vsub.s32 %v1005, %v1007
  %v1009 = vrot.slane %v990, %v1008
  %v1011 = vunpack.c.l.s4 1966171168
  %v1012 = vunpack.c.0.s8 %v1011
  %v1013 = vlaneseq
  %v1014 = vshrl.u32 %v1013, 7
  %v1015 = vsub.s32 %v1012, %v1014
  %v1016 = vrot.slane %v989, %v1015
  %v1018 = vunpack.c.l.s4 1966171168
  %v1019 = vunpack.c.0.s8 %v1018
  %v1020 = vlaneseq
  %v1021 = vshrl.u32 %v1020, 7
  %v1022 = vsub.s32 %v1019, %v1021
  %v1023 = vrot.slane %v991, %v1022
  %v1025 = vunpack.c.l.s4 1966171168
  %v1026 = vunpack.c.0.s8 %v1025
  %v1027 = vlaneseq
  %v1028 = vshrl.u32 %v1027, 7
  %v1029 = vsub.s32 %v1026, %v1028
  %v1030 = vrot.slane %v992, %v1029
  %v1032 = vunpack.c.l.s4 1966171168
  %v1033 = vunpack.c.0.s8 %v1032
  %v1034 = vlaneseq
  %v1035 = vshrl.u32 %v1034, 7
  %v1036 = vsub.s32 %v1033, %v1035
  %v1037 = vrot.slane %v994, %v1036
  %v1039 = vunpack.c.l.s4 1966171168
  %v1040 = vunpack.c.0.s8 %v1039
  %v1041 = vlaneseq
  %v1042 = vshrl.u32 %v1041, 7
  %v1043 = vsub.s32 %v1040, %v1042
  %v1044 = vrot.slane %v993, %v1043
  %v1046 = vunpack.c.l.s4 1966171168
  %v1047 = vunpack.c.0.s8 %v1046
  %v1048 = vlaneseq
  %v1049 = vshrl.u32 %v1048, 7
  %v1050 = vsub.s32 %v1047, %v1049
  %v1051 = vrot.slane %v995, %v1050
  %v1052 = vcombine.low %v1002, %v1030
  %v1053 = vcombine.high %v1002, %v1030
  %v1054 = vcombine.low %v1009, %v1037
  %v1055 = vcombine.low %v1016, %v1044
  %v1056 = vcombine.high %v1016, %v1044
  %v1057 = vcombine.low %v1023, %v1051
  %v1058 = vcombine.low %v71, %v72
  %v1059 = vcombine.high %v71, %v72
  %v1060 = vcombine.low %v73, %v74
  %v1061 = vcombine.high %v73, %v74
  %v1062 = vcombine.low %v75, %v76
  %v1063 = vcombine.high %v75, %v76
  %v1064 = vcombine.low %v77, %v78
  %v1065 = vcombine.high %v77, %v78
  %v1067 = vunpack.c.l.s4 1966171168
  %v1068 = vunpack.c.0.s8 %v1067
  %v1069 = vlaneseq
  %v1070 = vshrl.u32 %v1069, 7
  %v1071 = vsub.s32 %v1068, %v1070
  %v1072 = vrot.slane %v1058, %v1071
  %v1074 = vunpack.c.l.s4 1966171168
  %v1075 = vunpack.c.0.s8 %v1074
  %v1076 = vlaneseq
  %v1077 = vshrl.u32 %v1076, 7
  %v1078 = vsub.s32 %v1075, %v1077
  %v1079 = vrot.slane %v1059, %v1078
  %v1081 = vunpack.c.l.s4 1966171168
  %v1082 = vunpack.c.0.s8 %v1081
  %v1083 = vlaneseq
  %v1084 = vshrl.u32 %v1083, 7
  %v1085 = vsub.s32 %v1082, %v1084
  %v1086 = vrot.slane %v1060, %v1085
  %v1088 = vunpack.c.l.s4 1966171168
  %v1089 = vunpack.c.0.s8 %v1088
  %v1090 = vlaneseq
  %v1091 = vshrl.u32 %v1090, 7
  %v1092 = vsub.s32 %v1089, %v1091
  %v1093 = vrot.slane %v1061, %v1092
  %v1095 = vunpack.c.l.s4 1966171168
  %v1096 = vunpack.c.0.s8 %v1095
  %v1097 = vlaneseq
  %v1098 = vshrl.u32 %v1097, 7
  %v1099 = vsub.s32 %v1096, %v1098
  %v1100 = vrot.slane %v1062, %v1099
  %v1102 = vunpack.c.l.s4 1966171168
  %v1103 = vunpack.c.0.s8 %v1102
  %v1104 = vlaneseq
  %v1105 = vshrl.u32 %v1104, 7
  %v1106 = vsub.s32 %v1103, %v1105
  %v1107 = vrot.slane %v1063, %v1106
  %v1109 = vunpack.c.l.s4 1966171168
  %v1110 = vunpack.c.0.s8 %v1109
  %v1111 = vlaneseq
  %v1112 = vshrl.u32 %v1111, 7
  %v1113 = vsub.s32 %v1110, %v1112
  %v1114 = vrot.slane %v1064, %v1113
  %v1116 = vunpack.c.l.s4 1966171168
  %v1117 = vunpack.c.0.s8 %v1116
  %v1118 = vlaneseq
  %v1119 = vshrl.u32 %v1118, 7
  %v1120 = vsub.s32 %v1117, %v1119
  %v1121 = vrot.slane %v1065, %v1120
  %v1122 = vcombine.low %v1072, %v1086
  %v1123 = vcombine.high %v1072, %v1086
  %v1124 = vcombine.low %v1079, %v1093
  %v1125 = vcombine.high %v1079, %v1093
  %v1126 = vcombine.low %v1100, %v1114
  %v1127 = vcombine.high %v1100, %v1114
  %v1128 = vcombine.low %v1107, %v1121
  %v1129 = vcombine.high %v1107, %v1121
  %v1131 = vunpack.c.l.s4 1966171168
  %v1132 = vunpack.c.0.s8 %v1131
  %v1133 = vlaneseq
  %v1134 = vshrl.u32 %v1133, 7
  %v1135 = vsub.s32 %v1132, %v1134
  %v1136 = vrot.slane %v1122, %v1135
  %v1138 = vunpack.c.l.s4 1966171168
  %v1139 = vunpack.c.0.s8 %v1138
  %v1140 = vlaneseq
  %v1141 = vshrl.u32 %v1140, 7
  %v1142 = vsub.s32 %v1139, %v1141
  %v1143 = vrot.slane %v1124, %v1142
  %v1145 = vunpack.c.l.s4 1966171168
  %v1146 = vunpack.c.0.s8 %v1145
  %v1147 = vlaneseq
  %v1148 = vshrl.u32 %v1147, 7
  %v1149 = vsub.s32 %v1146, %v1148
  %v1150 = vrot.slane %v1123, %v1149
  %v1152 = vunpack.c.l.s4 1966171168
  %v1153 = vunpack.c.0.s8 %v1152
  %v1154 = vlaneseq
  %v1155 = vshrl.u32 %v1154, 7
  %v1156 = vsub.s32 %v1153, %v1155
  %v1157 = vrot.slane %v1125, %v1156
  %v1159 = vunpack.c.l.s4 1966171168
  %v1160 = vunpack.c.0.s8 %v1159
  %v1161 = vlaneseq
  %v1162 = vshrl.u32 %v1161, 7
  %v1163 = vsub.s32 %v1160, %v1162
  %v1164 = vrot.slane %v1126, %v1163
  %v1166 = vunpack.c.l.s4 1966171168
  %v1167 = vunpack.c.0.s8 %v1166
  %v1168 = vlaneseq
  %v1169 = vshrl.u32 %v1168, 7
  %v1170 = vsub.s32 %v1167, %v1169
  %v1171 = vrot.slane %v1128, %v1170
  %v1173 = vunpack.c.l.s4 1966171168
  %v1174 = vunpack.c.0.s8 %v1173
  %v1175 = vlaneseq
  %v1176 = vshrl.u32 %v1175, 7
  %v1177 = vsub.s32 %v1174, %v1176
  %v1178 = vrot.slane %v1127, %v1177
  %v1180 = vunpack.c.l.s4 1966171168
  %v1181 = vunpack.c.0.s8 %v1180
  %v1182 = vlaneseq
  %v1183 = vshrl.u32 %v1182, 7
  %v1184 = vsub.s32 %v1181, %v1183
  %v1185 = vrot.slane %v1129, %v1184
  %v1186 = vcombine.low %v1136, %v1164
  %v1187 = vcombine.high %v1136, %v1164
  %v1188 = vcombine.low %v1143, %v1171
  %v1189 = vcombine.low %v1150, %v1178
  %v1190 = vcombine.high %v1150, %v1178
  %v1191 = vcombine.low %v1157, %v1185
  %v1192 = vcombine.low %v79, %v80
  %v1193 = vcombine.high %v79, %v80
  %v1194 = vcombine.low %v81, %v82
  %v1195 = vcombine.high %v81, %v82
  %v1196 = vcombine.low %v83, %v84
  %v1197 = vcombine.high %v83, %v84
  %v1198 = vcombine.low %v85, %v86
  %v1199 = vcombine.high %v85, %v86
  %v1201 = vunpack.c.l.s4 1966171168
  %v1202 = vunpack.c.0.s8 %v1201
  %v1203 = vlaneseq
  %v1204 = vshrl.u32 %v1203, 7
  %v1205 = vsub.s32 %v1202, %v1204
  %v1206 = vrot.slane %v1192, %v1205
  %v1208 = vunpack.c.l.s4 1966171168
  %v1209 = vunpack.c.0.s8 %v1208
  %v1210 = vlaneseq
  %v1211 = vshrl.u32 %v1210, 7
  %v1212 = vsub.s32 %v1209, %v1211
  %v1213 = vrot.slane %v1193, %v1212
  %v1215 = vunpack.c.l.s4 1966171168
  %v1216 = vunpack.c.0.s8 %v1215
  %v1217 = vlaneseq
  %v1218 = vshrl.u32 %v1217, 7
  %v1219 = vsub.s32 %v1216, %v1218
  %v1220 = vrot.slane %v1194, %v1219
  %v1222 = vunpack.c.l.s4 1966171168
  %v1223 = vunpack.c.0.s8 %v1222
  %v1224 = vlaneseq
  %v1225 = vshrl.u32 %v1224, 7
  %v1226 = vsub.s32 %v1223, %v1225
  %v1227 = vrot.slane %v1195, %v1226
  %v1229 = vunpack.c.l.s4 1966171168
  %v1230 = vunpack.c.0.s8 %v1229
  %v1231 = vlaneseq
  %v1232 = vshrl.u32 %v1231, 7
  %v1233 = vsub.s32 %v1230, %v1232
  %v1234 = vrot.slane %v1196, %v1233
  %v1236 = vunpack.c.l.s4 1966171168
  %v1237 = vunpack.c.0.s8 %v1236
  %v1238 = vlaneseq
  %v1239 = vshrl.u32 %v1238, 7
  %v1240 = vsub.s32 %v1237, %v1239
  %v1241 = vrot.slane %v1197, %v1240
  %v1243 = vunpack.c.l.s4 1966171168
  %v1244 = vunpack.c.0.s8 %v1243
  %v1245 = vlaneseq
  %v1246 = vshrl.u32 %v1245, 7
  %v1247 = vsub.s32 %v1244, %v1246
  %v1248 = vrot.slane %v1198, %v1247
  %v1250 = vunpack.c.l.s4 1966171168
  %v1251 = vunpack.c.0.s8 %v1250
  %v1252 = vlaneseq
  %v1253 = vshrl.u32 %v1252, 7
  %v1254 = vsub.s32 %v1251, %v1253
  %v1255 = vrot.slane %v1199, %v1254
  %v1256 = vcombine.low %v1206, %v1220
  %v1257 = vcombine.high %v1206, %v1220
  %v1258 = vcombine.low %v1213, %v1227
  %v1259 = vcombine.high %v1213, %v1227
  %v1260 = vcombine.low %v1234, %v1248
  %v1261 = vcombine.high %v1234, %v1248
  %v1262 = vcombine.low %v1241, %v1255
  %v1263 = vcombine.high %v1241, %v1255
  %v1265 = vunpack.c.l.s4 1966171168
  %v1266 = vunpack.c.0.s8 %v1265
  %v1267 = vlaneseq
  %v1268 = vshrl.u32 %v1267, 7
  %v1269 = vsub.s32 %v1266, %v1268
  %v1270 = vrot.slane %v1256, %v1269
  %v1272 = vunpack.c.l.s4 1966171168
  %v1273 = vunpack.c.0.s8 %v1272
  %v1274 = vlaneseq
  %v1275 = vshrl.u32 %v1274, 7
  %v1276 = vsub.s32 %v1273, %v1275
  %v1277 = vrot.slane %v1258, %v1276
  %v1279 = vunpack.c.l.s4 1966171168
  %v1280 = vunpack.c.0.s8 %v1279
  %v1281 = vlaneseq
  %v1282 = vshrl.u32 %v1281, 7
  %v1283 = vsub.s32 %v1280, %v1282
  %v1284 = vrot.slane %v1257, %v1283
  %v1286 = vunpack.c.l.s4 1966171168
  %v1287 = vunpack.c.0.s8 %v1286
  %v1288 = vlaneseq
  %v1289 = vshrl.u32 %v1288, 7
  %v1290 = vsub.s32 %v1287, %v1289
  %v1291 = vrot.slane %v1259, %v1290
  %v1293 = vunpack.c.l.s4 1966171168
  %v1294 = vunpack.c.0.s8 %v1293
  %v1295 = vlaneseq
  %v1296 = vshrl.u32 %v1295, 7
  %v1297 = vsub.s32 %v1294, %v1296
  %v1298 = vrot.slane %v1260, %v1297
  %v1300 = vunpack.c.l.s4 1966171168
  %v1301 = vunpack.c.0.s8 %v1300
  %v1302 = vlaneseq
  %v1303 = vshrl.u32 %v1302, 7
  %v1304 = vsub.s32 %v1301, %v1303
  %v1305 = vrot.slane %v1262, %v1304
  %v1307 = vunpack.c.l.s4 1966171168
  %v1308 = vunpack.c.0.s8 %v1307
  %v1309 = vlaneseq
  %v1310 = vshrl.u32 %v1309, 7
  %v1311 = vsub.s32 %v1308, %v1310
  %v1312 = vrot.slane %v1261, %v1311
  %v1314 = vunpack.c.l.s4 1966171168
  %v1315 = vunpack.c.0.s8 %v1314
  %v1316 = vlaneseq
  %v1317 = vshrl.u32 %v1316, 7
  %v1318 = vsub.s32 %v1315, %v1317
  %v1319 = vrot.slane %v1263, %v1318
  %v1320 = vcombine.low %v1270, %v1298
  %v1321 = vcombine.high %v1270, %v1298
  %v1322 = vcombine.low %v1277, %v1305
  %v1323 = vcombine.low %v1284, %v1312
  %v1324 = vcombine.high %v1284, %v1312
  %v1325 = vcombine.low %v1291, %v1319
  %v1470 = vunpack.c.l.b16 %v87
  %v1471 = vunpack.c.l.b16 %v88
  %v1472 = vunpack.c.l.b16 %v89
  %v1473 = vunpack.c.l.b16 %v90
  %v1474 = vunpack.c.l.b16 %v91
  %v1475 = vunpack.c.l.b16 %v92
  %v1476 = vunpack.c.l.b16 %v93
  %v1477 = vunpack.c.l.b16 %v94
  %v1478 = vunpack.c.l.b16 %v95
  %v1479 = vunpack.c.l.b16 %v96
  %v1480 = vunpack.c.l.b16 %v97
  %v1481 = vunpack.c.l.b16 %v98
  %v1482 = vunpack.c.l.b16 %v99
  %v1483 = vunpack.c.l.b16 %v100
  %v1484 = vunpack.c.l.b16 %v101
  %v1485 = vunpack.c.l.b16 %v102
  %v1486 = vunpack.c.l.b16 %v103
  %v1487 = vunpack.c.l.b16 %v104
  %v1488 = vunpack.c.l.b16 %v105
  %v1489 = vunpack.c.l.b16 %v106
  %v1490 = vunpack.c.l.b16 %v107
  %v1491 = vunpack.c.l.b16 %v108
  %v1492 = vunpack.c.l.b16 %v109
  %v1493 = vunpack.c.l.b16 %v110
  %v1494 = vunpack.c.l.b16 %v111
  %v1495 = vunpack.c.l.b16 %v112
  %v1496 = vunpack.c.l.b16 %v113
  %v1497 = vunpack.c.l.b16 %v114
  %v1498 = vunpack.c.l.b16 %v115
  %v1499 = vunpack.c.l.b16 %v116
  %v1500 = vunpack.c.l.b16 %v117
  %v1501 = vunpack.c.l.b16 %v118
  %v1502 = vunpack.c.l.b16 %v119
  %v1503 = vunpack.c.l.b16 %v120
  %v1504 = vunpack.c.l.b16 %v121
  %v1505 = vunpack.c.l.b16 %v122
  %v1506 = vunpack.c.l.b16 %v123
  %v1507 = vunpack.c.l.b16 %v124
  %v1508 = vunpack.c.l.b16 %v125
  %v1509 = vunpack.c.l.b16 %v126
  %v1510 = vunpack.c.l.b16 %v127
  %v1511 = vunpack.c.l.b16 %v128
  %v1512 = vunpack.c.l.b16 %v129
  %v1513 = vunpack.c.l.b16 %v130
  %v1514 = vunpack.c.l.b16 %v131
  %v1515 = vunpack.c.l.b16 %v132
  %v1516 = vunpack.c.l.b16 %v133
  %v1517 = vunpack.c.l.b16 %v134
  %v1518 = vunpack.c.l.b16 %v135
  %v1519 = vunpack.c.l.b16 %v136
  %v1520 = vunpack.c.l.b16 %v137
  %v1521 = vunpack.c.l.b16 %v138
  %v1522 = vunpack.c.l.b16 %v139
  %v1523 = vunpack.c.l.b16 %v140
  %v1524 = vunpack.c.l.b16 %v141
  %v1525 = vunpack.c.l.b16 %v142
  %v1526 = vunpack.c.l.b16 %v143
  %v1527 = vunpack.c.l.b16 %v144
  %v1528 = vunpack.c.l.b16 %v145
  %v1529 = vunpack.c.l.b16 %v146
  %v1530 = vunpack.c.l.b16 %v147
  %v1531 = vunpack.c.l.b16 %v148
  %v1532 = vunpack.c.l.b16 %v149
  %v1533 = vunpack.c.l.b16 %v150
  %v1534 = vunpack.c.l.b16 %v151
  %v1535 = vunpack.c.l.b16 %v152
  %v1536 = vunpack.c.l.b16 %v153
  %v1537 = vunpack.c.l.b16 %v154
  %v1538 = vunpack.c.l.b16 %v155
  %v1539 = vunpack.c.l.b16 %v156
  %v1540 = vunpack.c.l.b16 %v157
  %v1541 = vunpack.c.l.b16 %v158
  %v1542 = vunpack.c.l.b16 %v159
  %v1543 = vunpack.c.l.b16 %v160
  %v1544 = vunpack.c.l.b16 %v161
  %v1545 = vunpack.c.l.b16 %v162
  %v1546 = vunpack.c.l.b16 %v163
  %v1547 = vunpack.c.l.b16 %v164
  %v1548 = vunpack.c.l.b16 %v165
  %v1549 = vunpack.c.l.b16 %v166
  %v1550 = vunpack.c.l.b16 %v167
  %v1551 = vunpack.c.l.b16 %v168
  %v1552 = vunpack.c.l.b16 %v169
  %v1553 = vunpack.c.l.b16 %v170
  %v1554 = vunpack.c.l.b16 %v171
  %v1555 = vunpack.c.l.b16 %v172
  %v1556 = vunpack.c.l.b16 %v173
  %v1557 = vunpack.c.l.b16 %v174
  %v1558 = vunpack.c.l.b16 %v175
  %v1559 = vunpack.c.l.b16 %v176
  %v1560 = vunpack.c.l.b16 %v177
  %v1561 = vunpack.c.l.b16 %v178
  %v1562 = vunpack.c.l.b16 %v179
  %v1563 = vunpack.c.l.b16 %v180
  %v1564 = vunpack.c.l.b16 %v181
  %v1565 = vunpack.c.l.b16 %v182
  %v1566 = vpack.c.b16 %v1471, %v1470
  %v1567 = vpack.c.b16 %v1473, %v1472
  %v1568 = vpack.c.b16 %v1475, %v1474
  %v1569 = vpack.c.b16 %v1477, %v1476
  %v1570 = vpack.c.b16 %v1479, %v1478
  %v1571 = vpack.c.b16 %v1481, %v1480
  %v1572 = vpack.c.b16 %v1483, %v1482
  %v1573 = vpack.c.b16 %v1485, %v1484
  %v1574 = vpack.c.b16 %v1487, %v1486
  %v1575 = vpack.c.b16 %v1489, %v1488
  %v1576 = vpack.c.b16 %v1491, %v1490
  %v1577 = vpack.c.b16 %v1493, %v1492
  %v1578 = vpack.c.b16 %v1495, %v1494
  %v1579 = vpack.c.b16 %v1497, %v1496
  %v1580 = vpack.c.b16 %v1499, %v1498
  %v1581 = vpack.c.b16 %v1501, %v1500
  %v1582 = vpack.c.b16 %v1503, %v1502
  %v1583 = vpack.c.b16 %v1505, %v1504
  %v1584 = vpack.c.b16 %v1507, %v1506
  %v1585 = vpack.c.b16 %v1509, %v1508
  %v1586 = vpack.c.b16 %v1511, %v1510
  %v1587 = vpack.c.b16 %v1513, %v1512
  %v1588 = vpack.c.b16 %v1515, %v1514
  %v1589 = vpack.c.b16 %v1517, %v1516
  %v1590 = vpack.c.b16 %v1519, %v1518
  %v1591 = vpack.c.b16 %v1521, %v1520
  %v1592 = vpack.c.b16 %v1523, %v1522
  %v1593 = vpack.c.b16 %v1525, %v1524
  %v1594 = vpack.c.b16 %v1527, %v1526
  %v1595 = vpack.c.b16 %v1529, %v1528
  %v1596 = vpack.c.b16 %v1531, %v1530
  %v1597 = vpack.c.b16 %v1533, %v1532
  %v1598 = vpack.c.b16 %v1535, %v1534
  %v1599 = vpack.c.b16 %v1537, %v1536
  %v1600 = vpack.c.b16 %v1539, %v1538
  %v1601 = vpack.c.b16 %v1541, %v1540
  %v1602 = vpack.c.b16 %v1543, %v1542
  %v1603 = vpack.c.b16 %v1545, %v1544
  %v1604 = vpack.c.b16 %v1547, %v1546
  %v1605 = vpack.c.b16 %v1549, %v1548
  %v1606 = vpack.c.b16 %v1551, %v1550
  %v1607 = vpack.c.b16 %v1553, %v1552
  %v1608 = vpack.c.b16 %v1555, %v1554
  %v1609 = vpack.c.b16 %v1557, %v1556
  %v1610 = vpack.c.b16 %v1559, %v1558
  %v1611 = vpack.c.b16 %v1561, %v1560
  %v1612 = vpack.c.b16 %v1563, %v1562
  %v1613 = vpack.c.b16 %v1565, %v1564
  %1662 = vmatprep.subr.bf16.mxu0 0
  %1663 = vmatpush1.bf16.msra.mxu0 %v1566
  %1664 = vmatprep.subr.bf16.mxu0 0
  %1665 = vmatpush1.bf16.msra.mxu0 %v1567
  %1666 = vmatprep.subr.bf16.mxu0 0
  %1667 = vmatpush1.bf16.msra.mxu0 %v1568
  %1668 = vmatprep.subr.bf16.mxu0 0
  %1669 = vmatpush1.bf16.msra.mxu0 %v1569
  %1670 = vmatprep.subr.bf16.mxu0 0
  %1671 = vmatpush1.bf16.msra.mxu0 %v1570
  %1672 = vmatprep.subr.bf16.mxu0 0
  %1673 = vmatpush1.bf16.msra.mxu0 %v1571
  %1674 = vmatprep.subr.bf16.mxu0 0
  %1675 = vmatpush1.bf16.msra.mxu0 %v1572
  %1676 = vmatprep.subr.bf16.mxu0 0
  %1677 = vmatpush1.bf16.msra.mxu0 %v1573
  %1678 = vmatprep.subr.bf16.mxu0 0
  %1679 = vmatpush1.bf16.msra.mxu0 %v1574
  %1680 = vmatprep.subr.bf16.mxu0 0
  %1681 = vmatpush1.bf16.msra.mxu0 %v1575
  %1682 = vmatprep.subr.bf16.mxu0 0
  %1683 = vmatpush1.bf16.msra.mxu0 %v1576
  %1684 = vmatprep.subr.bf16.mxu0 0
  %1685 = vmatpush1.bf16.msra.mxu0 %v1577
  %1686 = vmatprep.subr.bf16.mxu0 0
  %1687 = vmatpush1.bf16.msra.mxu0 %v1578
  %1688 = vmatprep.subr.bf16.mxu0 0
  %1689 = vmatpush1.bf16.msra.mxu0 %v1579
  %1690 = vmatprep.subr.bf16.mxu0 0
  %1691 = vmatpush1.bf16.msra.mxu0 %v1580
  %1692 = vmatprep.subr.bf16.mxu0 0
  %1693 = vmatpush1.bf16.msra.mxu0 %v1581
  %1694 = vmatprep.mubr.bf16.mxu0 %v385
  %1695 = vmatmul.mubr.bf16.gmra.mrb[0].mxu0 %v382
  %v1696 = vpop.f32.mrb[0].mxu0
  %v1697 = vadd.f32 %v188, %v1696
  %v1698 = vpop.f32.mrb[0].mxu0
  %v1699 = vpop.f32.mrb[0].mxu0
  %v1700 = vadd.f32 %v188, %v1699
  %v1701 = vpop.f32.mrb[0].mxu0
  %1702 = vmatprep.mubr.bf16.mxu0 %v519
  %1703 = vmatmul.mubr.bf16.gmra.mrb[0].mxu0 %v516
  %v1704 = vpop.f32.mrb[0].mxu0
  %v1705 = vadd.f32 %v188, %v1704
  %v1706 = vpop.f32.mrb[0].mxu0
  %v1707 = vpop.f32.mrb[0].mxu0
  %v1708 = vadd.f32 %v188, %v1707
  %v1709 = vpop.f32.mrb[0].mxu0
  %1710 = vmatprep.mubr.bf16.mxu0 %v653
  %1711 = vmatmul.mubr.bf16.gmra.mrb[0].mxu0 %v650
  %v1712 = vpop.f32.mrb[0].mxu0
  %v1713 = vadd.f32 %v188, %v1712
  %v1714 = vpop.f32.mrb[0].mxu0
  %v1715 = vpop.f32.mrb[0].mxu0
  %v1716 = vadd.f32 %v188, %v1715
  %v1717 = vpop.f32.mrb[0].mxu0
  %1718 = vmatprep.mubr.bf16.mxu0 %v787
  %1719 = vmatmul.mubr.bf16.gmra.mrb[0].mxu0 %v784
  %v1720 = vpop.f32.mrb[0].mxu0
  %v1721 = vadd.f32 %v188, %v1720
  %v1722 = vpop.f32.mrb[0].mxu0
  %v1723 = vpop.f32.mrb[0].mxu0
  %v1724 = vadd.f32 %v188, %v1723
  %v1725 = vpop.f32.mrb[0].mxu0
  %1726 = vmatprep.mubr.bf16.mxu0 %v921
  %1727 = vmatmul.mubr.bf16.gmra.mrb[0].mxu0 %v918
  %v1728 = vpop.f32.mrb[0].mxu0
  %v1729 = vadd.f32 %v188, %v1728
  %v1730 = vpop.f32.mrb[0].mxu0
  %v1731 = vpop.f32.mrb[0].mxu0
  %v1732 = vadd.f32 %v188, %v1731
  %v1733 = vpop.f32.mrb[0].mxu0
  %1734 = vmatprep.mubr.bf16.mxu0 %v1055
  %1735 = vmatmul.mubr.bf16.gmra.mrb[0].mxu0 %v1052
  %v1736 = vpop.f32.mrb[0].mxu0
  %v1737 = vadd.f32 %v188, %v1736
  %v1738 = vpop.f32.mrb[0].mxu0
  %v1739 = vpop.f32.mrb[0].mxu0
  %v1740 = vadd.f32 %v188, %v1739
  %v1741 = vpop.f32.mrb[0].mxu0
  %1742 = vmatprep.mubr.bf16.mxu0 %v1189
  %1743 = vmatmul.mubr.bf16.gmra.mrb[0].mxu0 %v1186
  %v1744 = vpop.f32.mrb[0].mxu0
  %v1745 = vadd.f32 %v188, %v1744
  %v1746 = vpop.f32.mrb[0].mxu0
  %v1747 = vpop.f32.mrb[0].mxu0
  %v1748 = vadd.f32 %v188, %v1747
  %v1749 = vpop.f32.mrb[0].mxu0
  %1750 = vmatprep.mubr.bf16.mxu0 %v1323
  %1751 = vmatmul.mubr.bf16.gmra.mrb[0].mxu0 %v1320
  %v1752 = vpop.f32.mrb[0].mxu0
  %v1753 = vadd.f32 %v188, %v1752
  %v1754 = vpop.f32.mrb[0].mxu0
  %v1755 = vpop.f32.mrb[0].mxu0
  %v1756 = vadd.f32 %v188, %v1755
  %v1757 = vpop.f32.mrb[0].mxu0
  %1758 = vdwg.mxu0
  %1759 = vmatprep.subr.bf16.mxu0 0
  %1760 = vmatpush1.bf16.msra.mxu0 %v1582
  %1761 = vmatprep.subr.bf16.mxu0 0
  %1762 = vmatpush1.bf16.msra.mxu0 %v1583
  %1763 = vmatprep.subr.bf16.mxu0 0
  %1764 = vmatpush1.bf16.msra.mxu0 %v1584
  %1765 = vmatprep.subr.bf16.mxu0 0
  %1766 = vmatpush1.bf16.msra.mxu0 %v1585
  %1767 = vmatprep.subr.bf16.mxu0 0
  %1768 = vmatpush1.bf16.msra.mxu0 %v1586
  %1769 = vmatprep.subr.bf16.mxu0 0
  %1770 = vmatpush1.bf16.msra.mxu0 %v1587
  %1771 = vmatprep.subr.bf16.mxu0 0
  %1772 = vmatpush1.bf16.msra.mxu0 %v1588
  %1773 = vmatprep.subr.bf16.mxu0 0
  %1774 = vmatpush1.bf16.msra.mxu0 %v1589
  %1775 = vmatprep.subr.bf16.mxu0 0
  %1776 = vmatpush1.bf16.msra.mxu0 %v1590
  %1777 = vmatprep.subr.bf16.mxu0 0
  %1778 = vmatpush1.bf16.msra.mxu0 %v1591
  %1779 = vmatprep.subr.bf16.mxu0 0
  %1780 = vmatpush1.bf16.msra.mxu0 %v1592
  %1781 = vmatprep.subr.bf16.mxu0 0
  %1782 = vmatpush1.bf16.msra.mxu0 %v1593
  %1783 = vmatprep.subr.bf16.mxu0 0
  %1784 = vmatpush1.bf16.msra.mxu0 %v1594
  %1785 = vmatprep.subr.bf16.mxu0 0
  %1786 = vmatpush1.bf16.msra.mxu0 %v1595
  %1787 = vmatprep.subr.bf16.mxu0 0
  %1788 = vmatpush1.bf16.msra.mxu0 %v1596
  %1789 = vmatprep.subr.bf16.mxu0 0
  %1790 = vmatpush1.bf16.msra.mxu0 %v1597
  %1791 = vmatprep.mubr.bf16.mxu0 %v386
  %1792 = vmatmul.mubr.bf16.gmra.mrb[0].mxu0 %v383
  %v1793 = vpop.f32.mrb[0].mxu0
  %v1794 = vadd.f32 %v1697, %v1793
  %v1795 = vpop.f32.mrb[0].mxu0
  %v1796 = vpop.f32.mrb[0].mxu0
  %v1797 = vadd.f32 %v1700, %v1796
  %v1798 = vpop.f32.mrb[0].mxu0
  %1799 = vmatprep.mubr.bf16.mxu0 %v520
  %1800 = vmatmul.mubr.bf16.gmra.mrb[0].mxu0 %v517
  %v1801 = vpop.f32.mrb[0].mxu0
  %v1802 = vadd.f32 %v1705, %v1801
  %v1803 = vpop.f32.mrb[0].mxu0
  %v1804 = vpop.f32.mrb[0].mxu0
  %v1805 = vadd.f32 %v1708, %v1804
  %v1806 = vpop.f32.mrb[0].mxu0
  %1807 = vmatprep.mubr.bf16.mxu0 %v654
  %1808 = vmatmul.mubr.bf16.gmra.mrb[0].mxu0 %v651
  %v1809 = vpop.f32.mrb[0].mxu0
  %v1810 = vadd.f32 %v1713, %v1809
  %v1811 = vpop.f32.mrb[0].mxu0
  %v1812 = vpop.f32.mrb[0].mxu0
  %v1813 = vadd.f32 %v1716, %v1812
  %v1814 = vpop.f32.mrb[0].mxu0
  %1815 = vmatprep.mubr.bf16.mxu0 %v788
  %1816 = vmatmul.mubr.bf16.gmra.mrb[0].mxu0 %v785
  %v1817 = vpop.f32.mrb[0].mxu0
  %v1818 = vadd.f32 %v1721, %v1817
  %v1819 = vpop.f32.mrb[0].mxu0
  %v1820 = vpop.f32.mrb[0].mxu0
  %v1821 = vadd.f32 %v1724, %v1820
  %v1822 = vpop.f32.mrb[0].mxu0
  %1823 = vmatprep.mubr.bf16.mxu0 %v922
  %1824 = vmatmul.mubr.bf16.gmra.mrb[0].mxu0 %v919
  %v1825 = vpop.f32.mrb[0].mxu0
  %v1826 = vadd.f32 %v1729, %v1825
  %v1827 = vpop.f32.mrb[0].mxu0
  %v1828 = vpop.f32.mrb[0].mxu0
  %v1829 = vadd.f32 %v1732, %v1828
  %v1830 = vpop.f32.mrb[0].mxu0
  %1831 = vmatprep.mubr.bf16.mxu0 %v1056
  %1832 = vmatmul.mubr.bf16.gmra.mrb[0].mxu0 %v1053
  %v1833 = vpop.f32.mrb[0].mxu0
  %v1834 = vadd.f32 %v1737, %v1833
  %v1835 = vpop.f32.mrb[0].mxu0
  %v1836 = vpop.f32.mrb[0].mxu0
  %v1837 = vadd.f32 %v1740, %v1836
  %v1838 = vpop.f32.mrb[0].mxu0
  %1839 = vmatprep.mubr.bf16.mxu0 %v1190
  %1840 = vmatmul.mubr.bf16.gmra.mrb[0].mxu0 %v1187
  %v1841 = vpop.f32.mrb[0].mxu0
  %v1842 = vadd.f32 %v1745, %v1841
  %v1843 = vpop.f32.mrb[0].mxu0
  %v1844 = vpop.f32.mrb[0].mxu0
  %v1845 = vadd.f32 %v1748, %v1844
  %v1846 = vpop.f32.mrb[0].mxu0
  %1847 = vmatprep.mubr.bf16.mxu0 %v1324
  %1848 = vmatmul.mubr.bf16.gmra.mrb[0].mxu0 %v1321
  %v1849 = vpop.f32.mrb[0].mxu0
  %v1850 = vadd.f32 %v1753, %v1849
  %v1851 = vpop.f32.mrb[0].mxu0
  %v1852 = vpop.f32.mrb[0].mxu0
  %v1853 = vadd.f32 %v1756, %v1852
  %v1854 = vpop.f32.mrb[0].mxu0
  %1855 = vdwg.mxu0
  %1856 = vmatprep.subr.bf16.mxu0 0
  %1857 = vmatpush1.bf16.msra.mxu0 %v1598
  %1858 = vmatprep.subr.bf16.mxu0 0
  %1859 = vmatpush1.bf16.msra.mxu0 %v1599
  %1860 = vmatprep.subr.bf16.mxu0 0
  %1861 = vmatpush1.bf16.msra.mxu0 %v1600
  %1862 = vmatprep.subr.bf16.mxu0 0
  %1863 = vmatpush1.bf16.msra.mxu0 %v1601
  %1864 = vmatprep.subr.bf16.mxu0 0
  %1865 = vmatpush1.bf16.msra.mxu0 %v1602
  %1866 = vmatprep.subr.bf16.mxu0 0
  %1867 = vmatpush1.bf16.msra.mxu0 %v1603
  %1868 = vmatprep.subr.bf16.mxu0 0
  %1869 = vmatpush1.bf16.msra.mxu0 %v1604
  %1870 = vmatprep.subr.bf16.mxu0 0
  %1871 = vmatpush1.bf16.msra.mxu0 %v1605
  %1872 = vmatprep.subr.bf16.mxu0 0
  %1873 = vmatpush1.bf16.msra.mxu0 %v1606
  %1874 = vmatprep.subr.bf16.mxu0 0
  %1875 = vmatpush1.bf16.msra.mxu0 %v1607
  %1876 = vmatprep.subr.bf16.mxu0 0
  %1877 = vmatpush1.bf16.msra.mxu0 %v1608
  %1878 = vmatprep.subr.bf16.mxu0 0
  %1879 = vmatpush1.bf16.msra.mxu0 %v1609
  %1880 = vmatprep.subr.bf16.mxu0 0
  %1881 = vmatpush1.bf16.msra.mxu0 %v1610
  %1882 = vmatprep.subr.bf16.mxu0 0
  %1883 = vmatpush1.bf16.msra.mxu0 %v1611
  %1884 = vmatprep.subr.bf16.mxu0 0
  %1885 = vmatpush1.bf16.msra.mxu0 %v1612
  %1886 = vmatprep.subr.bf16.mxu0 0
  %1887 = vmatpush1.bf16.msra.mxu0 %v1613
  %1888 = vmatprep.mubr.bf16.mxu0 %v387
  %1889 = vmatmul.mubr.bf16.gmra.mrb[0].mxu0 %v384
  %v1890 = vpop.f32.mrb[0].mxu0
  %v1891 = vadd.f32 %v1794, %v1890
  %v1892 = vpop.f32.mrb[0].mxu0
  %v1893 = vpop.f32.mrb[0].mxu0
  %v1894 = vadd.f32 %v1797, %v1893
  %v1895 = vpop.f32.mrb[0].mxu0
  %1896 = vmatprep.mubr.bf16.mxu0 %v521
  %1897 = vmatmul.mubr.bf16.gmra.mrb[0].mxu0 %v518
  %v1898 = vpop.f32.mrb[0].mxu0
  %v1899 = vadd.f32 %v1802, %v1898
  %v1900 = vpop.f32.mrb[0].mxu0
  %v1901 = vpop.f32.mrb[0].mxu0
  %v1902 = vadd.f32 %v1805, %v1901
  %v1903 = vpop.f32.mrb[0].mxu0
  %1904 = vmatprep.mubr.bf16.mxu0 %v655
  %1905 = vmatmul.mubr.bf16.gmra.mrb[0].mxu0 %v652
  %v1906 = vpop.f32.mrb[0].mxu0
  %v1907 = vadd.f32 %v1810, %v1906
  %v1908 = vpop.f32.mrb[0].mxu0
  %v1909 = vpop.f32.mrb[0].mxu0
  %v1910 = vadd.f32 %v1813, %v1909
  %v1911 = vpop.f32.mrb[0].mxu0
  %1912 = vmatprep.mubr.bf16.mxu0 %v789
  %1913 = vmatmul.mubr.bf16.gmra.mrb[0].mxu0 %v786
  %v1914 = vpop.f32.mrb[0].mxu0
  %v1915 = vadd.f32 %v1818, %v1914
  %v1916 = vpop.f32.mrb[0].mxu0
  %v1917 = vpop.f32.mrb[0].mxu0
  %v1918 = vadd.f32 %v1821, %v1917
  %v1919 = vpop.f32.mrb[0].mxu0
  %1920 = vmatprep.mubr.bf16.mxu0 %v923
  %1921 = vmatmul.mubr.bf16.gmra.mrb[0].mxu0 %v920
  %v1922 = vpop.f32.mrb[0].mxu0
  %v1923 = vadd.f32 %v1826, %v1922
  %v1924 = vpop.f32.mrb[0].mxu0
  %v1925 = vpop.f32.mrb[0].mxu0
  %v1926 = vadd.f32 %v1829, %v1925
  %v1927 = vpop.f32.mrb[0].mxu0
  %1928 = vmatprep.mubr.bf16.mxu0 %v1057
  %1929 = vmatmul.mubr.bf16.gmra.mrb[0].mxu0 %v1054
  %v1930 = vpop.f32.mrb[0].mxu0
  %v1931 = vadd.f32 %v1834, %v1930
  %v1932 = vpop.f32.mrb[0].mxu0
  %v1933 = vpop.f32.mrb[0].mxu0
  %v1934 = vadd.f32 %v1837, %v1933
  %v1935 = vpop.f32.mrb[0].mxu0
  %1936 = vmatprep.mubr.bf16.mxu0 %v1191
  %1937 = vmatmul.mubr.bf16.gmra.mrb[0].mxu0 %v1188
  %v1938 = vpop.f32.mrb[0].mxu0
  %v1939 = vadd.f32 %v1842, %v1938
  %v1940 = vpop.f32.mrb[0].mxu0
  %v1941 = vpop.f32.mrb[0].mxu0
  %v1942 = vadd.f32 %v1845, %v1941
  %v1943 = vpop.f32.mrb[0].mxu0
  %1944 = vmatprep.mubr.bf16.mxu0 %v1325
  %1945 = vmatmul.mubr.bf16.gmra.mrb[0].mxu0 %v1322
  %v1946 = vpop.f32.mrb[0].mxu0
  %v1947 = vadd.f32 %v1850, %v1946
  %v1948 = vpop.f32.mrb[0].mxu0
  %v1949 = vpop.f32.mrb[0].mxu0
  %v1950 = vadd.f32 %v1853, %v1949
  %v1951 = vpop.f32.mrb[0].mxu0
  %1952 = vdwg.mxu0
  %v1953 = vmax.f32 %v1891, 0.0
  %v1954 = vmax.f32 %v1894, 0.0
  %v1955 = vmax.f32 %v1899, 0.0
  %v1956 = vmax.f32 %v1902, 0.0
  %v1957 = vmax.f32 %v1907, 0.0
  %v1958 = vmax.f32 %v1910, 0.0
  %v1959 = vmax.f32 %v1915, 0.0
  %v1960 = vmax.f32 %v1918, 0.0
  %v1961 = vmax.f32 %v1923, 0.0
  %v1962 = vmax.f32 %v1926, 0.0
  %v1963 = vmax.f32 %v1931, 0.0
  %v1964 = vmax.f32 %v1934, 0.0
  %v1965 = vmax.f32 %v1939, 0.0
  %v1966 = vmax.f32 %v1942, 0.0
  %v1967 = vmax.f32 %v1947, 0.0
  %v1968 = vmax.f32 %v1950, 0.0
  %v1969 = vld [vmem:[%s3] sm:$0x1]
  %v1970 = vld [vmem:[#allocation2] sm:$0x1]
  %1972 = vset.pattern.permute.xlu0 0
  %1973 = vperm.xlu0 %1972, %v1970
  %v1974 = vpop.permute.xlu0 %1973
  %v1976 = vlaneseq
  %v1977 = vshrl.u32 %v1976, 7
  %v1978 = vsub.s32 0, %v1977
  %v1979 = vrot.slane %v1974, %v1978
  %1980 = vmatprep.subr.mxu0 0.0
  %1981 = vmatpush1.xpose.msra.mxu0 %v1953
  %1982 = vmatprep.subr.mxu0 0.0
  %1983 = vmatpush1.xpose.msra.mxu0 %v1954
  %1984 = vmatprep.subr.mxu0 0.0
  %1985 = vmatpush1.xpose.msra.mxu0 %v1955
  %1986 = vmatprep.subr.mxu0 0.0
  %1987 = vmatpush1.xpose.msra.mxu0 %v1956
  %1988 = vmatprep.subr.mxu0 0.0
  %1989 = vmatpush1.xpose.msra.mxu0 %v1957
  %1990 = vmatprep.subr.mxu0 0.0
  %1991 = vmatpush1.xpose.msra.mxu0 %v1958
  %1992 = vmatprep.subr.mxu0 0.0
  %1993 = vmatpush1.xpose.msra.mxu0 %v1959
  %1994 = vmatprep.subr.mxu0 0.0
  %1995 = vmatpush1.xpose.msra.mxu0 %v1960
  %1996 = vmatprep.subr.mxu0 0.0
  %1997 = vmatpush1.xpose.msra.mxu0 %v1961
  %1998 = vmatprep.subr.mxu0 0.0
  %1999 = vmatpush1.xpose.msra.mxu0 %v1962
  %2000 = vmatprep.subr.mxu0 0.0
  %2001 = vmatpush1.xpose.msra.mxu0 %v1963
  %2002 = vmatprep.subr.mxu0 0.0
  %2003 = vmatpush1.xpose.msra.mxu0 %v1964
  %2004 = vmatprep.subr.mxu0 0.0
  %2005 = vmatpush1.xpose.msra.mxu0 %v1965
  %2006 = vmatprep.subr.mxu0 0.0
  %2007 = vmatpush1.xpose.msra.mxu0 %v1966
  %2008 = vmatprep.subr.mxu0 0.0
  %2009 = vmatpush1.xpose.msra.mxu0 %v1967
  %2010 = vmatprep.subr.mxu0 0.0
  %2011 = vmatpush1.xpose.msra.mxu0 %v1968
  %2012 = vmatprep.subr.mxu0 0.0
  %2013 = vmatpush1.xpose.msra.mxu0 0.0
  %2014 = vmatprep.subr.mxu0 0.0
  %2015 = vmatpush1.xpose.msra.mxu0 0.0
  %2016 = vmatprep.subr.mxu0 0.0
  %2017 = vmatpush1.xpose.msra.mxu0 0.0
  %2018 = vmatprep.subr.mxu0 0.0
  %2019 = vmatpush1.xpose.msra.mxu0 0.0
  %2020 = vmatprep.subr.mxu0 0.0
  %2021 = vmatpush1.xpose.msra.mxu0 0.0
  %2022 = vmatprep.subr.mxu0 0.0
  %2023 = vmatpush1.xpose.msra.mxu0 0.0
  %2024 = vmatprep.subr.mxu0 0.0
  %2025 = vmatpush1.xpose.msra.mxu0 0.0
  %2026 = vmatprep.subr.mxu0 0.0
  %2027 = vmatpush1.xpose.msra.mxu0 0.0
  %2028 = vmatprep.subr.mxu0 0.0
  %2029 = vmatpush1.xpose.msra.mxu0 0.0
  %2030 = vmatprep.subr.mxu0 0.0
  %2031 = vmatpush1.xpose.msra.mxu0 0.0
  %2032 = vmatprep.subr.mxu0 0.0
  %2033 = vmatpush1.xpose.msra.mxu0 0.0
  %2034 = vmatprep.subr.mxu0 0.0
  %2035 = vmatpush1.xpose.msra.mxu0 0.0
  %2036 = vmatprep.subr.mxu0 0.0
  %2037 = vmatpush1.xpose.msra.mxu0 0.0
  %2038 = vmatprep.subr.mxu0 0.0
  %2039 = vmatpush1.xpose.msra.mxu0 0.0
  %2040 = vmatprep.subr.mxu0 0.0
  %2041 = vmatpush1.xpose.msra.mxu0 0.0
  %2042 = vmatprep.subr.mxu0 0.0
  %2043 = vmatpush1.xpose.msra.mxu0 0.0
  %2044 = vmatprep.mubr.f32.mxu0 0.0
  %2045 = vmatmul.mubr.f32.gmra.mrb[0].mxu0 %v1969
  %v2046 = vpop.f32.mrb[0].mxu0
  %v2047 = vadd.f32 %v1979, %v2046
  %v2048 = vpop.f32.mrb[0].mxu0
  %2049 = vdwg.mxu0
  %2050 = vst [vmem:[%s5] sm:$0x1] %v2047
  // Predicated region
  $region22: #{chess_evaluator.1} parent=0 // pred_check
    _
  $region23: #{chess_evaluator.1} parent=0 // pred_check_branch
    %2052 = sbr.rel (0) target = $region25
  $region24: #{chess_evaluator.1} parent=0 // pred_region
    _
  $region25: #{chess_evaluator.1} parent=0 // pred_fallthru
    _
  // Predicated region
  $region26: #{chess_evaluator.1} parent=0 // pred_check
    _
  $region27: #{chess_evaluator.1} parent=0 // pred_check_branch
    %2054 = sbr.rel (0) target = $region29
  $region28: #{chess_evaluator.1} parent=0 // pred_region
    _
  $region29: #{chess_evaluator.1} parent=0 // pred_fallthru
    _

</llo_original>
